<compile_context>
chip_gen: v6e
topology: v6e:2x2x1
jax: 0.10.0
libtpu: 0.0.40
codegen_flags: <defaults>
</compile_context>

<pallas_src>
import math

import jax
import jax.numpy as jnp
from jax import lax
from jax.experimental import pallas as pl
from jax.experimental.pallas import tpu as pltpu


# ---------------------------------------------------------------------------
# Parameter construction (Conv2d OIHW weights, inference-mode BN folded in)
# ---------------------------------------------------------------------------

def make_conv_bn_params(key, cin, cout, k):
    kw, kg, kb, km, kv = jax.random.split(key, 5)
    w = jax.random.normal(kw, (cout, cin, k, k), jnp.float32) * 0.1     # torch OIHW
    gamma = 1.0 + 0.1 * jax.random.normal(kg, (cout,), jnp.float32)
    beta = 0.1 * jax.random.normal(kb, (cout,), jnp.float32)
    mean = 0.1 * jax.random.normal(km, (cout,), jnp.float32)
    var = jnp.abs(jax.random.normal(kv, (cout,), jnp.float32)) + 1.0
    eps = 1e-3                                                          # BatchNorm2d(eps=0.001)
    scale = gamma / jnp.sqrt(var + eps)
    w_folded = w * scale[:, None, None, None]                           # BN scale -> weight
    bias = (beta - mean * scale).reshape(cout, 1)                       # per-channel bias
    return w_folded, bias


def _stack_taps(w_oihw):
    """(O, I, 3, 3) -> (O, 9*I); column index = (3*dy + dx)*I + i."""
    o, i, kh, kw = w_oihw.shape
    return jnp.transpose(w_oihw, (0, 2, 3, 1)).reshape(o, kh * kw * i)


def _stem1_input_taps(x):
    """Host-side (XLA) prep of stem_1's input: for each of the 4 output parity
    phases, the 9 conv taps stacked along channels.  Pure static strided
    slicing of the raw input (about 2.25x the input size), no gather matrices.
    Returns (B, 4, 9*c1, H2*W2) with phase p = 2*py + px, tap t = 3*dy + dx."""
    B, c1, H0, W0 = x.shape
    H2, W2 = H0 // 4, W0 // 4
    xp = jnp.pad(x, ((0, 0), (0, 0), (1, 1), (1, 1)))      # conv padding = 1
    phases = []
    for py in range(2):
        for px in range(2):
            taps = []
            for dy in range(3):
                for dx in range(3):
                    h0, w0 = 2 * py + dy, 2 * px + dx
                    taps.append(xp[:, :,
                                   h0:h0 + 4 * H2 - 3:4,
                                   w0:w0 + 4 * W2 - 3:4])   # (B, c1, H2, W2)
            phases.append(jnp.concatenate(taps, axis=1))    # (B, 9*c1, H2, W2)
    xt = jnp.stack(phases, axis=1)                          # (B, 4, 9*c1, H2, W2)
    return xt.reshape(B, 4, 9 * c1, H2 * W2)


# ---------------------------------------------------------------------------
# StemBlock forward: single fused pallas_call
# ---------------------------------------------------------------------------

def stem_block_forward(x_nchw, params):
    B, c1, H0, W0 = x_nchw.shape
    # TODO(synk): support H/W not divisible by 4 (MaxPool2d ceil_mode windows
    # that overhang the border); YOLOv5-face inputs are multiples of 32.
    assert H0 % 4 == 0 and W0 % 4 == 0, "input H/W must be multiples of 4"

    w_s1, b_s1 = params["stem_1"]       # (c2, c1, 3, 3)
    w_s2a, b_s2a = params["stem_2a"]    # (c2//2, c2, 1, 1)
    w_s2b, b_s2b = params["stem_2b"]    # (c2, c2//2, 3, 3)
    w_s3, b_s3 = params["stem_3"]       # (c2, 2*c2, 1, 1)
    c2 = w_s1.shape[0]
    c2h = c2 // 2
    H1, W1 = H0 // 2, W0 // 2
    H2, W2 = H1 // 2, W1 // 2
    S2 = H2 * W2

    # Host prep (cheap XLA slicing of the raw input) + kernel-format weights.
    x_taps = _stem1_input_taps(x_nchw)                  # (B, 4, 9*c1, S2)
    w1s = _stack_taps(w_s1)                             # (c2, 9*c1)
    w2a = w_s2a.reshape(c2h, c2)                        # (c2//2, c2)
    w2bs = _stack_taps(w_s2b)                           # (c2, 9*c2h)
    w3 = w_s3.reshape(c2, 2 * c2)                       # concat order: (stem_2b, stem_2p)

    def kernel(xt_ref, w1_ref, b1_ref, w2a_ref, b2a_ref, w2b_ref, b2b_ref,
               w3_ref, b3_ref, o_ref, pad_ref):
        f32 = jnp.float32

        def silu(v):
            return v * jax.nn.sigmoid(v)

        # ---- stem_1: 3x3/s2 conv, produced directly in 4 parity phases.
        # One MXU matmul per phase, contraction K = 9*c1 (taps pre-stacked).
        s1 = []
        for p in range(4):
            xt = xt_ref[0, p].astype(f32)                               # (9*c1, S2)
            s1.append(silu(jnp.dot(w1_ref[...], xt,
                                   preferred_element_type=f32) + b1_ref[...]))

        # ---- stem_2p: 2x2/s2 maxpool == elementwise max of the 4 phases (VPU).
        pool = jnp.maximum(jnp.maximum(s1[0], s1[1]),
                           jnp.maximum(s1[2], s1[3]))                   # (c2, S2)

        # ---- stem_2a: 1x1 conv per phase, written into a zero-padded scratch
        # (1-pixel top/left zero border so stem_2b's shifted taps are plain
        # contiguous slices).  Boundary zeroed every step (scratch is per-core).
        pad_ref[:, :, 0:1, :] = jnp.zeros((4, c2h, 1, W2 + 1), f32)
        pad_ref[:, :, :, 0:1] = jnp.zeros((4, c2h, H2 + 1, 1), f32)
        for p in range(4):
            s2a = silu(jnp.dot(w2a_ref[...], s1[p],
                               preferred_element_type=f32) + b2a_ref[...])
            pad_ref[p, :, 1:H2 + 1, 1:W2 + 1] = s2a.reshape(c2h, H2, W2)

        # ---- stem_2b: 9 taps = contiguous shifted views of the padded phases,
        # stacked on sublanes -> one matmul with K = 9*c2h.
        taps = []
        for dy in range(3):
            for dx in range(3):
                ph = 2 * ((dy + 1) % 2) + ((dx + 1) % 2)   # phase (row, col parity)
                r0 = 0 if dy == 0 else 1                   # -1 row shift for dy == 0
                c0 = 0 if dx == 0 else 1                   # -1 col shift for dx == 0
                v = pad_ref[ph, :, r0:r0 + H2, c0:c0 + W2]  # (c2h, H2, W2)
                taps.append(v.reshape(c2h, S2))
        x2b = jnp.concatenate(taps, axis=0)                             # (9*c2h, S2)
        s2b = silu(jnp.dot(w2b_ref[...], x2b,
                           preferred_element_type=f32) + b2b_ref[...])  # (c2, S2)

        # ---- stem_3: 1x1 conv over concat([stem_2b, stem_2p]) as ONE K=2*c2 matmul.
        cat = jnp.concatenate([s2b, pool], axis=0)                      # (2*c2, S2)
        y3 = jnp.dot(w3_ref[...], cat, preferred_element_type=f32) + b3_ref[...]
        o_ref[0] = silu(y3).astype(o_ref.dtype)

    def full(arr):
        shape = tuple(arr.shape)
        return pl.BlockSpec(shape, lambda b, _n=len(shape): (0,) * _n)

    # Explicit VMEM budget derived from actual buffer sizes (+50% headroom).
    itemsize = 4
    blk_bytes = (4 * 9 * c1 * S2 + c2 * S2) * itemsize                  # per-image in/out blocks
    w_bytes = sum(int(math.prod(a.shape)) for a in
                  (w1s, b_s1, w2a, b_s2a, w2bs, b_s2b, w3, b_s3)) * itemsize
    scratch_bytes = 4 * c2h * (H2 + 1) * (W2 + 1) * itemsize
    live_bytes = (4 * c2 + 4 * c2h + 2 * 9 * c2h + 4 * c2) * S2 * itemsize
    vmem_limit = int(1.5 * (2 * (blk_bytes + w_bytes) + scratch_bytes + live_bytes))
    vmem_limit = min(max(vmem_limit, 8 * 1024 * 1024), 96 * 1024 * 1024)

    out = pl.pallas_call(
        kernel,
        out_shape=jax.ShapeDtypeStruct((B, c2, S2), x_nchw.dtype),
        grid=(B,),
        in_specs=[
            pl.BlockSpec((1, 4, 9 * c1, S2), lambda b: (b, 0, 0, 0)),
            full(w1s), full(b_s1),
            full(w2a), full(b_s2a),
            full(w2bs), full(b_s2b),
            full(w3), full(b_s3),
        ],
        out_specs=pl.BlockSpec((1, c2, S2), lambda b: (b, 0, 0)),
        scratch_shapes=[pltpu.VMEM((4, c2h, H2 + 1, W2 + 1), jnp.float32)],
        compiler_params=pltpu.CompilerParams(
            dimension_semantics=("parallel",),
            vmem_limit_bytes=vmem_limit),
    )(x_taps, w1s, b_s1, w2a, b_s2a, w2bs, b_s2b, w3, b_s3)

    return out.reshape(B, c2, H2, W2)


# ---------------------------------------------------------------------------
# Pure-JAX reference (same folded params) for a correctness check
# ---------------------------------------------------------------------------

def _ref_forward(x, params):
    def conv_bn_silu(xi, w, b, stride, pad):
        y = lax.conv_general_dilated(
            xi, w, window_strides=(stride, stride),
            padding=[(pad, pad), (pad, pad)],
            dimension_numbers=("NCHW", "OIHW", "NCHW"))
        y = y + b.reshape(1, -1, 1, 1)
        return y * jax.nn.sigmoid(y)

    w_s1, b_s1 = params["stem_1"]
    w_s2a, b_s2a = params["stem_2a"]
    w_s2b, b_s2b = params["stem_2b"]
    w_s3, b_s3 = params["stem_3"]

    s1 = conv_bn_silu(x, w_s1, b_s1, 2, 1)
    s2a = conv_bn_silu(s1, w_s2a, b_s2a, 1, 0)
    s2b = conv_bn_silu(s2a, w_s2b, b_s2b, 2, 1)
    s2p = lax.reduce_window(s1, -jnp.inf, lax.max, (1, 1, 2, 2), (1, 1, 2, 2), "VALID")
    cat = jnp.concatenate([s2b, s2p], axis=1)
    return conv_bn_silu(cat, w_s3, b_s3, 1, 0)


if __name__ == "__main__":
    key = jax.random.PRNGKey(0)
    kx, k1, k2, k3, k4 = jax.random.split(key, 5)

    # StemBlock(c1=4, c2=8, k=3, s=2) on a (2, 4, 16, 16) input.
    B, c1, H, W = 2, 4, 16, 16
    c2 = 8

    x = jax.random.normal(kx, (B, c1, H, W), jnp.float32)

    params = {
        "stem_1":  make_conv_bn_params(k1, c1, c2, 3),        # Conv(c1, c2, 3, s=2, p=1)
        "stem_2a": make_conv_bn_params(k2, c2, c2 // 2, 1),   # Conv(c2, c2//2, 1)
        "stem_2b": make_conv_bn_params(k3, c2 // 2, c2, 3),   # Conv(c2//2, c2, 3, s=2, p=1)
        "stem_3":  make_conv_bn_params(k4, 2 * c2, c2, 1),    # Conv(2*c2, c2, 1)
    }

    fwd = jax.jit(stem_block_forward)
    out = fwd(x, params)
    jax.block_until_ready(out)
    assert out.shape == (B, c2, H // 4, W // 4), out.shape

    # Correctness check against a pure-JAX reference (loose tol: default MXU precision).
    ref = _ref_forward(x, params)
    err = float(jnp.max(jnp.abs(out - ref)))
    assert err < 5e-2, f"max abs error vs reference: {err}"

    print("KERNEL_OK")
</pallas_src>

<mosaic_0001>
module attributes {stable_mosaic.version = 11 : i64} {
  func.func @kernel(%arg0: i32, %arg1: memref<1x4x36x16xf32, #tpu.memory_space<vmem>>, %arg2: memref<8x36xf32, #tpu.memory_space<vmem>>, %arg3: memref<8x1xf32, #tpu.memory_space<vmem>>, %arg4: memref<4x8xf32, #tpu.memory_space<vmem>>, %arg5: memref<4x1xf32, #tpu.memory_space<vmem>>, %arg6: memref<8x36xf32, #tpu.memory_space<vmem>>, %arg7: memref<8x1xf32, #tpu.memory_space<vmem>>, %arg8: memref<8x16xf32, #tpu.memory_space<vmem>>, %arg9: memref<8x1xf32, #tpu.memory_space<vmem>>, %arg10: memref<1x8x16xf32, #tpu.memory_space<vmem>>, %arg11: memref<4x4x5x5xf32, #tpu.memory_space<vmem>>) attributes {dimension_semantics = [#tpu.dimension_semantics<parallel>], iteration_bounds = array<i64: 2>, scalar_prefetch = 0 : i64, scratch_operands = 1 : i64, tpu.core_type = #tpu.core_type<tc>, window_params = [{transform_indices = @transform_0, window_bounds = array<i64: 1, 4, 36, 16>}, {pipeline_mode = #tpu.pipeline_mode<synchronous>, transform_indices = @transform_1, window_bounds = array<i64: 8, 36>}, {pipeline_mode = #tpu.pipeline_mode<synchronous>, transform_indices = @transform_2, window_bounds = array<i64: 8, 1>}, {pipeline_mode = #tpu.pipeline_mode<synchronous>, transform_indices = @transform_3, window_bounds = array<i64: 4, 8>}, {pipeline_mode = #tpu.pipeline_mode<synchronous>, transform_indices = @transform_4, window_bounds = array<i64: 4, 1>}, {pipeline_mode = #tpu.pipeline_mode<synchronous>, transform_indices = @transform_5, window_bounds = array<i64: 8, 36>}, {pipeline_mode = #tpu.pipeline_mode<synchronous>, transform_indices = @transform_6, window_bounds = array<i64: 8, 1>}, {pipeline_mode = #tpu.pipeline_mode<synchronous>, transform_indices = @transform_7, window_bounds = array<i64: 8, 16>}, {pipeline_mode = #tpu.pipeline_mode<synchronous>, transform_indices = @transform_8, window_bounds = array<i64: 8, 1>}, {transform_indices = @transform_9, window_bounds = array<i64: 1, 8, 16>}]} {
    %c0 = arith.constant 0 : index
    %c0_0 = arith.constant 0 : index
    %c0_1 = arith.constant 0 : index
    %c0_2 = arith.constant 0 : index
    %0 = vector.load %arg1[%c0, %c0_0, %c0_1, %c0_2] : memref<1x4x36x16xf32, #tpu.memory_space<vmem>>, vector<1x1x36x16xf32>
    %1 = vector.shape_cast %0 : vector<1x1x36x16xf32> to vector<36x16xf32>
    %c0_3 = arith.constant 0 : index
    %c0_4 = arith.constant 0 : index
    %2 = vector.load %arg2[%c0_3, %c0_4] : memref<8x36xf32, #tpu.memory_space<vmem>>, vector<8x36xf32>
    %cst = arith.constant dense<0.000000e+00> : vector<8x16xf32>
    %3 = tpu.matmul %2, %1, %cst {dimension_numbers = #tpu.dot_dimension_numbers<[1], [0], [0], [1], [0, 0, 1, 1], [], []>} : vector<8x36xf32>, vector<36x16xf32>, vector<8x16xf32> -> vector<8x16xf32>
    %c0_5 = arith.constant 0 : index
    %c0_6 = arith.constant 0 : index
    %4 = vector.load %arg3[%c0_5, %c0_6] : memref<8x1xf32, #tpu.memory_space<vmem>>, vector<8x1xf32>
    %5 = vector.broadcast %4 : vector<8x1xf32> to vector<8x16xf32>
    %6 = arith.addf %3, %5 : vector<8x16xf32>
    %7 = arith.negf %6 : vector<8x16xf32>
    %8 = math.exp %7 : vector<8x16xf32>
    %cst_7 = arith.constant 1.000000e+00 : f32
    %9 = vector.broadcast %cst_7 : f32 to vector<8x16xf32>
    %10 = arith.addf %9, %8 : vector<8x16xf32>
    %11 = arith.divf %9, %10 : vector<8x16xf32>
    %12 = arith.mulf %6, %11 : vector<8x16xf32>
    %c0_8 = arith.constant 0 : index
    %c1 = arith.constant 1 : index
    %c0_9 = arith.constant 0 : index
    %c0_10 = arith.constant 0 : index
    %13 = vector.load %arg1[%c0_8, %c1, %c0_9, %c0_10] : memref<1x4x36x16xf32, #tpu.memory_space<vmem>>, vector<1x1x36x16xf32>
    %14 = vector.shape_cast %13 : vector<1x1x36x16xf32> to vector<36x16xf32>
    %c0_11 = arith.constant 0 : index
    %c0_12 = arith.constant 0 : index
    %15 = vector.load %arg2[%c0_11, %c0_12] : memref<8x36xf32, #tpu.memory_space<vmem>>, vector<8x36xf32>
    %cst_13 = arith.constant dense<0.000000e+00> : vector<8x16xf32>
    %16 = tpu.matmul %15, %14, %cst_13 {dimension_numbers = #tpu.dot_dimension_numbers<[1], [0], [0], [1], [0, 0, 1, 1], [], []>} : vector<8x36xf32>, vector<36x16xf32>, vector<8x16xf32> -> vector<8x16xf32>
    %c0_14 = arith.constant 0 : index
    %c0_15 = arith.constant 0 : index
    %17 = vector.load %arg3[%c0_14, %c0_15] : memref<8x1xf32, #tpu.memory_space<vmem>>, vector<8x1xf32>
    %18 = vector.broadcast %17 : vector<8x1xf32> to vector<8x16xf32>
    %19 = arith.addf %16, %18 : vector<8x16xf32>
    %20 = arith.negf %19 : vector<8x16xf32>
    %21 = math.exp %20 : vector<8x16xf32>
    %cst_16 = arith.constant 1.000000e+00 : f32
    %22 = vector.broadcast %cst_16 : f32 to vector<8x16xf32>
    %23 = arith.addf %22, %21 : vector<8x16xf32>
    %24 = arith.divf %22, %23 : vector<8x16xf32>
    %25 = arith.mulf %19, %24 : vector<8x16xf32>
    %c0_17 = arith.constant 0 : index
    %c2 = arith.constant 2 : index
    %c0_18 = arith.constant 0 : index
    %c0_19 = arith.constant 0 : index
    %26 = vector.load %arg1[%c0_17, %c2, %c0_18, %c0_19] : memref<1x4x36x16xf32, #tpu.memory_space<vmem>>, vector<1x1x36x16xf32>
    %27 = vector.shape_cast %26 : vector<1x1x36x16xf32> to vector<36x16xf32>
    %c0_20 = arith.constant 0 : index
    %c0_21 = arith.constant 0 : index
    %28 = vector.load %arg2[%c0_20, %c0_21] : memref<8x36xf32, #tpu.memory_space<vmem>>, vector<8x36xf32>
    %cst_22 = arith.constant dense<0.000000e+00> : vector<8x16xf32>
    %29 = tpu.matmul %28, %27, %cst_22 {dimension_numbers = #tpu.dot_dimension_numbers<[1], [0], [0], [1], [0, 0, 1, 1], [], []>} : vector<8x36xf32>, vector<36x16xf32>, vector<8x16xf32> -> vector<8x16xf32>
    %c0_23 = arith.constant 0 : index
    %c0_24 = arith.constant 0 : index
    %30 = vector.load %arg3[%c0_23, %c0_24] : memref<8x1xf32, #tpu.memory_space<vmem>>, vector<8x1xf32>
    %31 = vector.broadcast %30 : vector<8x1xf32> to vector<8x16xf32>
    %32 = arith.addf %29, %31 : vector<8x16xf32>
    %33 = arith.negf %32 : vector<8x16xf32>
    %34 = math.exp %33 : vector<8x16xf32>
    %cst_25 = arith.constant 1.000000e+00 : f32
    %35 = vector.broadcast %cst_25 : f32 to vector<8x16xf32>
    %36 = arith.addf %35, %34 : vector<8x16xf32>
    %37 = arith.divf %35, %36 : vector<8x16xf32>
    %38 = arith.mulf %32, %37 : vector<8x16xf32>
    %c0_26 = arith.constant 0 : index
    %c3 = arith.constant 3 : index
    %c0_27 = arith.constant 0 : index
    %c0_28 = arith.constant 0 : index
    %39 = vector.load %arg1[%c0_26, %c3, %c0_27, %c0_28] : memref<1x4x36x16xf32, #tpu.memory_space<vmem>>, vector<1x1x36x16xf32>
    %40 = vector.shape_cast %39 : vector<1x1x36x16xf32> to vector<36x16xf32>
    %c0_29 = arith.constant 0 : index
    %c0_30 = arith.constant 0 : index
    %41 = vector.load %arg2[%c0_29, %c0_30] : memref<8x36xf32, #tpu.memory_space<vmem>>, vector<8x36xf32>
    %cst_31 = arith.constant dense<0.000000e+00> : vector<8x16xf32>
    %42 = tpu.matmul %41, %40, %cst_31 {dimension_numbers = #tpu.dot_dimension_numbers<[1], [0], [0], [1], [0, 0, 1, 1], [], []>} : vector<8x36xf32>, vector<36x16xf32>, vector<8x16xf32> -> vector<8x16xf32>
    %c0_32 = arith.constant 0 : index
    %c0_33 = arith.constant 0 : index
    %43 = vector.load %arg3[%c0_32, %c0_33] : memref<8x1xf32, #tpu.memory_space<vmem>>, vector<8x1xf32>
    %44 = vector.broadcast %43 : vector<8x1xf32> to vector<8x16xf32>
    %45 = arith.addf %42, %44 : vector<8x16xf32>
    %46 = arith.negf %45 : vector<8x16xf32>
    %47 = math.exp %46 : vector<8x16xf32>
    %cst_34 = arith.constant 1.000000e+00 : f32
    %48 = vector.broadcast %cst_34 : f32 to vector<8x16xf32>
    %49 = arith.addf %48, %47 : vector<8x16xf32>
    %50 = arith.divf %48, %49 : vector<8x16xf32>
    %51 = arith.mulf %45, %50 : vector<8x16xf32>
    %52 = arith.maximumf %12, %25 : vector<8x16xf32>
    %53 = arith.maximumf %38, %51 : vector<8x16xf32>
    %54 = arith.maximumf %52, %53 : vector<8x16xf32>
    %cst_35 = arith.constant 0.000000e+00 : f32
    %55 = vector.broadcast %cst_35 : f32 to vector<4x4x1x5xf32>
    %c0_36 = arith.constant 0 : index
    %c0_37 = arith.constant 0 : index
    %c0_38 = arith.constant 0 : index
    %c0_39 = arith.constant 0 : index
    %56 = vector.load %arg11[%c0_36, %c0_37, %c0_38, %c0_39] : memref<4x4x5x5xf32, #tpu.memory_space<vmem>>, vector<4x4x1x5xf32>
    tpu.vector_store %arg11[%c0_36, %c0_37, %c0_38, %c0_39], %55 {strides = array<i32>} : memref<4x4x5x5xf32, #tpu.memory_space<vmem>>, vector<4x4x1x5xf32>,
    %cst_40 = arith.constant 0.000000e+00 : f32
    %57 = vector.broadcast %cst_40 : f32 to vector<4x4x5x1xf32>
    %c0_41 = arith.constant 0 : index
    %c0_42 = arith.constant 0 : index
    %c0_43 = arith.constant 0 : index
    %c0_44 = arith.constant 0 : index
    %58 = vector.load %arg11[%c0_41, %c0_42, %c0_43, %c0_44] : memref<4x4x5x5xf32, #tpu.memory_space<vmem>>, vector<4x4x5x1xf32>
    tpu.vector_store %arg11[%c0_41, %c0_42, %c0_43, %c0_44], %57 {strides = array<i32>} : memref<4x4x5x5xf32, #tpu.memory_space<vmem>>, vector<4x4x5x1xf32>,
    %c0_45 = arith.constant 0 : index
    %c0_46 = arith.constant 0 : index
    %59 = vector.load %arg4[%c0_45, %c0_46] : memref<4x8xf32, #tpu.memory_space<vmem>>, vector<4x8xf32>
    %cst_47 = arith.constant dense<0.000000e+00> : vector<4x16xf32>
    %60 = tpu.matmul %59, %12, %cst_47 {dimension_numbers = #tpu.dot_dimension_numbers<[1], [0], [0], [1], [0, 0, 1, 1], [], []>} : vector<4x8xf32>, vector<8x16xf32>, vector<4x16xf32> -> vector<4x16xf32>
    %c0_48 = arith.constant 0 : index
    %c0_49 = arith.constant 0 : index
    %61 = vector.load %arg5[%c0_48, %c0_49] : memref<4x1xf32, #tpu.memory_space<vmem>>, vector<4x1xf32>
    %62 = vector.broadcast %61 : vector<4x1xf32> to vector<4x16xf32>
    %63 = arith.addf %60, %62 : vector<4x16xf32>
    %64 = arith.negf %63 : vector<4x16xf32>
    %65 = math.exp %64 : vector<4x16xf32>
    %cst_50 = arith.constant 1.000000e+00 : f32
    %66 = vector.broadcast %cst_50 : f32 to vector<4x16xf32>
    %67 = arith.addf %66, %65 : vector<4x16xf32>
    %68 = arith.divf %66, %67 : vector<4x16xf32>
    %69 = arith.mulf %63, %68 : vector<4x16xf32>
    %70 = vector.shape_cast %69 : vector<4x16xf32> to vector<4x4x4xf32>
    %c0_51 = arith.constant 0 : index
    %c0_52 = arith.constant 0 : index
    %c1_53 = arith.constant 1 : index
    %c1_54 = arith.constant 1 : index
    %71 = vector.load %arg11[%c0_51, %c0_52, %c1_53, %c1_54] : memref<4x4x5x5xf32, #tpu.memory_space<vmem>>, vector<1x4x4x4xf32>
    %72 = vector.shape_cast %71 : vector<1x4x4x4xf32> to vector<4x4x4xf32>
    %73 = vector.shape_cast %70 : vector<4x4x4xf32> to vector<1x4x4x4xf32>
    tpu.vector_store %arg11[%c0_51, %c0_52, %c1_53, %c1_54], %73 {strides = array<i32>} : memref<4x4x5x5xf32, #tpu.memory_space<vmem>>, vector<1x4x4x4xf32>,
    %c0_55 = arith.constant 0 : index
    %c0_56 = arith.constant 0 : index
    %74 = vector.load %arg4[%c0_55, %c0_56] : memref<4x8xf32, #tpu.memory_space<vmem>>, vector<4x8xf32>
    %cst_57 = arith.constant dense<0.000000e+00> : vector<4x16xf32>
    %75 = tpu.matmul %74, %25, %cst_57 {dimension_numbers = #tpu.dot_dimension_numbers<[1], [0], [0], [1], [0, 0, 1, 1], [], []>} : vector<4x8xf32>, vector<8x16xf32>, vector<4x16xf32> -> vector<4x16xf32>
    %c0_58 = arith.constant 0 : index
    %c0_59 = arith.constant 0 : index
    %76 = vector.load %arg5[%c0_58, %c0_59] : memref<4x1xf32, #tpu.memory_space<vmem>>, vector<4x1xf32>
    %77 = vector.broadcast %76 : vector<4x1xf32> to vector<4x16xf32>
    %78 = arith.addf %75, %77 : vector<4x16xf32>
    %79 = arith.negf %78 : vector<4x16xf32>
    %80 = math.exp %79 : vector<4x16xf32>
    %cst_60 = arith.constant 1.000000e+00 : f32
    %81 = vector.broadcast %cst_60 : f32 to vector<4x16xf32>
    %82 = arith.addf %81, %80 : vector<4x16xf32>
    %83 = arith.divf %81, %82 : vector<4x16xf32>
    %84 = arith.mulf %78, %83 : vector<4x16xf32>
    %85 = vector.shape_cast %84 : vector<4x16xf32> to vector<4x4x4xf32>
    %c1_61 = arith.constant 1 : index
    %c0_62 = arith.constant 0 : index
    %c1_63 = arith.constant 1 : index
    %c1_64 = arith.constant 1 : index
    %86 = vector.load %arg11[%c1_61, %c0_62, %c1_63, %c1_64] : memref<4x4x5x5xf32, #tpu.memory_space<vmem>>, vector<1x4x4x4xf32>
    %87 = vector.shape_cast %86 : vector<1x4x4x4xf32> to vector<4x4x4xf32>
    %88 = vector.shape_cast %85 : vector<4x4x4xf32> to vector<1x4x4x4xf32>
    tpu.vector_store %arg11[%c1_61, %c0_62, %c1_63, %c1_64], %88 {strides = array<i32>} : memref<4x4x5x5xf32, #tpu.memory_space<vmem>>, vector<1x4x4x4xf32>,
    %c0_65 = arith.constant 0 : index
    %c0_66 = arith.constant 0 : index
    %89 = vector.load %arg4[%c0_65, %c0_66] : memref<4x8xf32, #tpu.memory_space<vmem>>, vector<4x8xf32>
    %cst_67 = arith.constant dense<0.000000e+00> : vector<4x16xf32>
    %90 = tpu.matmul %89, %38, %cst_67 {dimension_numbers = #tpu.dot_dimension_numbers<[1], [0], [0], [1], [0, 0, 1, 1], [], []>} : vector<4x8xf32>, vector<8x16xf32>, vector<4x16xf32> -> vector<4x16xf32>
    %c0_68 = arith.constant 0 : index
    %c0_69 = arith.constant 0 : index
    %91 = vector.load %arg5[%c0_68, %c0_69] : memref<4x1xf32, #tpu.memory_space<vmem>>, vector<4x1xf32>
    %92 = vector.broadcast %91 : vector<4x1xf32> to vector<4x16xf32>
    %93 = arith.addf %90, %92 : vector<4x16xf32>
    %94 = arith.negf %93 : vector<4x16xf32>
    %95 = math.exp %94 : vector<4x16xf32>
    %cst_70 = arith.constant 1.000000e+00 : f32
    %96 = vector.broadcast %cst_70 : f32 to vector<4x16xf32>
    %97 = arith.addf %96, %95 : vector<4x16xf32>
    %98 = arith.divf %96, %97 : vector<4x16xf32>
    %99 = arith.mulf %93, %98 : vector<4x16xf32>
    %100 = vector.shape_cast %99 : vector<4x16xf32> to vector<4x4x4xf32>
    %c2_71 = arith.constant 2 : index
    %c0_72 = arith.constant 0 : index
    %c1_73 = arith.constant 1 : index
    %c1_74 = arith.constant 1 : index
    %101 = vector.load %arg11[%c2_71, %c0_72, %c1_73, %c1_74] : memref<4x4x5x5xf32, #tpu.memory_space<vmem>>, vector<1x4x4x4xf32>
    %102 = vector.shape_cast %101 : vector<1x4x4x4xf32> to vector<4x4x4xf32>
    %103 = vector.shape_cast %100 : vector<4x4x4xf32> to vector<1x4x4x4xf32>
    tpu.vector_store %arg11[%c2_71, %c0_72, %c1_73, %c1_74], %103 {strides = array<i32>} : memref<4x4x5x5xf32, #tpu.memory_space<vmem>>, vector<1x4x4x4xf32>,
    %c0_75 = arith.constant 0 : index
    %c0_76 = arith.constant 0 : index
    %104 = vector.load %arg4[%c0_75, %c0_76] : memref<4x8xf32, #tpu.memory_space<vmem>>, vector<4x8xf32>
    %cst_77 = arith.constant dense<0.000000e+00> : vector<4x16xf32>
    %105 = tpu.matmul %104, %51, %cst_77 {dimension_numbers = #tpu.dot_dimension_numbers<[1], [0], [0], [1], [0, 0, 1, 1], [], []>} : vector<4x8xf32>, vector<8x16xf32>, vector<4x16xf32> -> vector<4x16xf32>
    %c0_78 = arith.constant 0 : index
    %c0_79 = arith.constant 0 : index
    %106 = vector.load %arg5[%c0_78, %c0_79] : memref<4x1xf32, #tpu.memory_space<vmem>>, vector<4x1xf32>
    %107 = vector.broadcast %106 : vector<4x1xf32> to vector<4x16xf32>
    %108 = arith.addf %105, %107 : vector<4x16xf32>
    %109 = arith.negf %108 : vector<4x16xf32>
    %110 = math.exp %109 : vector<4x16xf32>
    %cst_80 = arith.constant 1.000000e+00 : f32
    %111 = vector.broadcast %cst_80 : f32 to vector<4x16xf32>
    %112 = arith.addf %111, %110 : vector<4x16xf32>
    %113 = arith.divf %111, %112 : vector<4x16xf32>
    %114 = arith.mulf %108, %113 : vector<4x16xf32>
    %115 = vector.shape_cast %114 : vector<4x16xf32> to vector<4x4x4xf32>
    %c3_81 = arith.constant 3 : index
    %c0_82 = arith.constant 0 : index
    %c1_83 = arith.constant 1 : index
    %c1_84 = arith.constant 1 : index
    %116 = vector.load %arg11[%c3_81, %c0_82, %c1_83, %c1_84] : memref<4x4x5x5xf32, #tpu.memory_space<vmem>>, vector<1x4x4x4xf32>
    %117 = vector.shape_cast %116 : vector<1x4x4x4xf32> to vector<4x4x4xf32>
    %118 = vector.shape_cast %115 : vector<4x4x4xf32> to vector<1x4x4x4xf32>
    tpu.vector_store %arg11[%c3_81, %c0_82, %c1_83, %c1_84], %118 {strides = array<i32>} : memref<4x4x5x5xf32, #tpu.memory_space<vmem>>, vector<1x4x4x4xf32>,
    %c3_85 = arith.constant 3 : index
    %c0_86 = arith.constant 0 : index
    %c0_87 = arith.constant 0 : index
    %c0_88 = arith.constant 0 : index
    %119 = vector.load %arg11[%c3_85, %c0_86, %c0_87, %c0_88] : memref<4x4x5x5xf32, #tpu.memory_space<vmem>>, vector<1x4x4x4xf32>
    %120 = vector.shape_cast %119 : vector<1x4x4x4xf32> to vector<4x4x4xf32>
    %121 = vector.shape_cast %120 : vector<4x4x4xf32> to vector<4x16xf32>
    %c2_89 = arith.constant 2 : index
    %c0_90 = arith.constant 0 : index
    %c0_91 = arith.constant 0 : index
    %c1_92 = arith.constant 1 : index
    %122 = vector.load %arg11[%c2_89, %c0_90, %c0_91, %c1_92] : memref<4x4x5x5xf32, #tpu.memory_space<vmem>>, vector<1x4x4x4xf32>
    %123 = vector.shape_cast %122 : vector<1x4x4x4xf32> to vector<4x4x4xf32>
    %124 = vector.shape_cast %123 : vector<4x4x4xf32> to vector<4x16xf32>
    %c3_93 = arith.constant 3 : index
    %c0_94 = arith.constant 0 : index
    %c0_95 = arith.constant 0 : index
    %c1_96 = arith.constant 1 : index
    %125 = vector.load %arg11[%c3_93, %c0_94, %c0_95, %c1_96] : memref<4x4x5x5xf32, #tpu.memory_space<vmem>>, vector<1x4x4x4xf32>
    %126 = vector.shape_cast %125 : vector<1x4x4x4xf32> to vector<4x4x4xf32>
    %127 = vector.shape_cast %126 : vector<4x4x4xf32> to vector<4x16xf32>
    %c1_97 = arith.constant 1 : index
    %c0_98 = arith.constant 0 : index
    %c1_99 = arith.constant 1 : index
    %c0_100 = arith.constant 0 : index
    %128 = vector.load %arg11[%c1_97, %c0_98, %c1_99, %c0_100] : memref<4x4x5x5xf32, #tpu.memory_space<vmem>>, vector<1x4x4x4xf32>
    %129 = vector.shape_cast %128 : vector<1x4x4x4xf32> to vector<4x4x4xf32>
    %130 = vector.shape_cast %129 : vector<4x4x4xf32> to vector<4x16xf32>
    %c0_101 = arith.constant 0 : index
    %c0_102 = arith.constant 0 : index
    %c1_103 = arith.constant 1 : index
    %c1_104 = arith.constant 1 : index
    %131 = vector.load %arg11[%c0_101, %c0_102, %c1_103, %c1_104] : memref<4x4x5x5xf32, #tpu.memory_space<vmem>>, vector<1x4x4x4xf32>
    %132 = vector.shape_cast %131 : vector<1x4x4x4xf32> to vector<4x4x4xf32>
    %133 = vector.shape_cast %132 : vector<4x4x4xf32> to vector<4x16xf32>
    %c1_105 = arith.constant 1 : index
    %c0_106 = arith.constant 0 : index
    %c1_107 = arith.constant 1 : index
    %c1_108 = arith.constant 1 : index
    %134 = vector.load %arg11[%c1_105, %c0_106, %c1_107, %c1_108] : memref<4x4x5x5xf32, #tpu.memory_space<vmem>>, vector<1x4x4x4xf32>
    %135 = vector.shape_cast %134 : vector<1x4x4x4xf32> to vector<4x4x4xf32>
    %136 = vector.shape_cast %135 : vector<4x4x4xf32> to vector<4x16xf32>
    %c3_109 = arith.constant 3 : index
    %c0_110 = arith.constant 0 : index
    %c1_111 = arith.constant 1 : index
    %c0_112 = arith.constant 0 : index
    %137 = vector.load %arg11[%c3_109, %c0_110, %c1_111, %c0_112] : memref<4x4x5x5xf32, #tpu.memory_space<vmem>>, vector<1x4x4x4xf32>
    %138 = vector.shape_cast %137 : vector<1x4x4x4xf32> to vector<4x4x4xf32>
    %139 = vector.shape_cast %138 : vector<4x4x4xf32> to vector<4x16xf32>
    %c2_113 = arith.constant 2 : index
    %c0_114 = arith.constant 0 : index
    %c1_115 = arith.constant 1 : index
    %c1_116 = arith.constant 1 : index
    %140 = vector.load %arg11[%c2_113, %c0_114, %c1_115, %c1_116] : memref<4x4x5x5xf32, #tpu.memory_space<vmem>>, vector<1x4x4x4xf32>
    %141 = vector.shape_cast %140 : vector<1x4x4x4xf32> to vector<4x4x4xf32>
    %142 = vector.shape_cast %141 : vector<4x4x4xf32> to vector<4x16xf32>
    %c3_117 = arith.constant 3 : index
    %c0_118 = arith.constant 0 : index
    %c1_119 = arith.constant 1 : index
    %c1_120 = arith.constant 1 : index
    %143 = vector.load %arg11[%c3_117, %c0_118, %c1_119, %c1_120] : memref<4x4x5x5xf32, #tpu.memory_space<vmem>>, vector<1x4x4x4xf32>
    %144 = vector.shape_cast %143 : vector<1x4x4x4xf32> to vector<4x4x4xf32>
    %145 = vector.shape_cast %144 : vector<4x4x4xf32> to vector<4x16xf32>
    %146 = tpu.concatenate %121, %124, %127, %130, %133, %136, %139, %142, %145 in 0 : vector<4x16xf32>, vector<4x16xf32>, vector<4x16xf32>, vector<4x16xf32>, vector<4x16xf32>, vector<4x16xf32>, vector<4x16xf32>, vector<4x16xf32>, vector<4x16xf32> -> vector<36x16xf32>
    %c0_121 = arith.constant 0 : index
    %c0_122 = arith.constant 0 : index
    %147 = vector.load %arg6[%c0_121, %c0_122] : memref<8x36xf32, #tpu.memory_space<vmem>>, vector<8x36xf32>
    %cst_123 = arith.constant dense<0.000000e+00> : vector<8x16xf32>
    %148 = tpu.matmul %147, %146, %cst_123 {dimension_numbers = #tpu.dot_dimension_numbers<[1], [0], [0], [1], [0, 0, 1, 1], [], []>} : vector<8x36xf32>, vector<36x16xf32>, vector<8x16xf32> -> vector<8x16xf32>
    %c0_124 = arith.constant 0 : index
    %c0_125 = arith.constant 0 : index
    %149 = vector.load %arg7[%c0_124, %c0_125] : memref<8x1xf32, #tpu.memory_space<vmem>>, vector<8x1xf32>
    %150 = vector.broadcast %149 : vector<8x1xf32> to vector<8x16xf32>
    %151 = arith.addf %148, %150 : vector<8x16xf32>
    %152 = arith.negf %151 : vector<8x16xf32>
    %153 = math.exp %152 : vector<8x16xf32>
    %cst_126 = arith.constant 1.000000e+00 : f32
    %154 = vector.broadcast %cst_126 : f32 to vector<8x16xf32>
    %155 = arith.addf %154, %153 : vector<8x16xf32>
    %156 = arith.divf %154, %155 : vector<8x16xf32>
    %157 = arith.mulf %151, %156 : vector<8x16xf32>
    %158 = tpu.concatenate %157, %54 in 0 : vector<8x16xf32>, vector<8x16xf32> -> vector<16x16xf32>
    %c0_127 = arith.constant 0 : index
    %c0_128 = arith.constant 0 : index
    %159 = vector.load %arg8[%c0_127, %c0_128] : memref<8x16xf32, #tpu.memory_space<vmem>>, vector<8x16xf32>
    %cst_129 = arith.constant dense<0.000000e+00> : vector<8x16xf32>
    %160 = tpu.matmul %159, %158, %cst_129 {dimension_numbers = #tpu.dot_dimension_numbers<[1], [0], [0], [1], [0, 0, 1, 1], [], []>} : vector<8x16xf32>, vector<16x16xf32>, vector<8x16xf32> -> vector<8x16xf32>
    %c0_130 = arith.constant 0 : index
    %c0_131 = arith.constant 0 : index
    %161 = vector.load %arg9[%c0_130, %c0_131] : memref<8x1xf32, #tpu.memory_space<vmem>>, vector<8x1xf32>
    %162 = vector.broadcast %161 : vector<8x1xf32> to vector<8x16xf32>
    %163 = arith.addf %160, %162 : vector<8x16xf32>
    %164 = arith.negf %163 : vector<8x16xf32>
    %165 = math.exp %164 : vector<8x16xf32>
    %cst_132 = arith.constant 1.000000e+00 : f32
    %166 = vector.broadcast %cst_132 : f32 to vector<8x16xf32>
    %167 = arith.addf %166, %165 : vector<8x16xf32>
    %168 = arith.divf %166, %167 : vector<8x16xf32>
    %169 = arith.mulf %163, %168 : vector<8x16xf32>
    %c0_133 = arith.constant 0 : index
    %c0_134 = arith.constant 0 : index
    %c0_135 = arith.constant 0 : index
    %170 = vector.load %arg10[%c0_133, %c0_134, %c0_135] : memref<1x8x16xf32, #tpu.memory_space<vmem>>, vector<1x8x16xf32>
    %171 = vector.shape_cast %170 : vector<1x8x16xf32> to vector<8x16xf32>
    %172 = vector.shape_cast %169 : vector<8x16xf32> to vector<1x8x16xf32>
    tpu.vector_store %arg10[%c0_133, %c0_134, %c0_135], %172 {strides = array<i32>} : memref<1x8x16xf32, #tpu.memory_space<vmem>>, vector<1x8x16xf32>,
    return
  }
  func.func @transform_0(%arg0: i32) -> (i32, i32, i32, i32) {
    %c0_i32 = arith.constant 0 : i32
    %c0_i32_0 = arith.constant 0 : i32
    %c0_i32_1 = arith.constant 0 : i32
    %c0_i32_2 = arith.constant 0 : i32
    return %arg0, %c0_i32, %c0_i32_0, %c0_i32_1 : i32, i32, i32, i32
  }
  func.func @transform_1(%arg0: i32) -> (i32, i32) {
    %c0_i32 = arith.constant 0 : i32
    %c0_i32_0 = arith.constant 0 : i32
    %c0_i32_1 = arith.constant 0 : i32
    return %c0_i32, %c0_i32_0 : i32, i32
  }
  func.func @transform_2(%arg0: i32) -> (i32, i32) {
    %c0_i32 = arith.constant 0 : i32
    %c0_i32_0 = arith.constant 0 : i32
    %c0_i32_1 = arith.constant 0 : i32
    return %c0_i32, %c0_i32_0 : i32, i32
  }
  func.func @transform_3(%arg0: i32) -> (i32, i32) {
    %c0_i32 = arith.constant 0 : i32
    %c0_i32_0 = arith.constant 0 : i32
    %c0_i32_1 = arith.constant 0 : i32
    return %c0_i32, %c0_i32_0 : i32, i32
  }
  func.func @transform_4(%arg0: i32) -> (i32, i32) {
    %c0_i32 = arith.constant 0 : i32
    %c0_i32_0 = arith.constant 0 : i32
    %c0_i32_1 = arith.constant 0 : i32
    return %c0_i32, %c0_i32_0 : i32, i32
  }
  func.func @transform_5(%arg0: i32) -> (i32, i32) {
    %c0_i32 = arith.constant 0 : i32
    %c0_i32_0 = arith.constant 0 : i32
    %c0_i32_1 = arith.constant 0 : i32
    return %c0_i32, %c0_i32_0 : i32, i32
  }
  func.func @transform_6(%arg0: i32) -> (i32, i32) {
    %c0_i32 = arith.constant 0 : i32
    %c0_i32_0 = arith.constant 0 : i32
    %c0_i32_1 = arith.constant 0 : i32
    return %c0_i32, %c0_i32_0 : i32, i32
  }
  func.func @transform_7(%arg0: i32) -> (i32, i32) {
    %c0_i32 = arith.constant 0 : i32
    %c0_i32_0 = arith.constant 0 : i32
    %c0_i32_1 = arith.constant 0 : i32
    return %c0_i32, %c0_i32_0 : i32, i32
  }
  func.func @transform_8(%arg0: i32) -> (i32, i32) {
    %c0_i32 = arith.constant 0 : i32
    %c0_i32_0 = arith.constant 0 : i32
    %c0_i32_1 = arith.constant 0 : i32
    return %c0_i32, %c0_i32_0 : i32, i32
  }
  func.func @transform_9(%arg0: i32) -> (i32, i32, i32) {
    %c0_i32 = arith.constant 0 : i32
    %c0_i32_0 = arith.constant 0 : i32
    %c0_i32_1 = arith.constant 0 : i32
    return %arg0, %c0_i32, %c0_i32_0 : i32, i32, i32
  }
}

</mosaic_0001>

<llo_original>
// kernel: stem_block_forward.1
$region0: #{stem_block_forward.1}
  #allocation0 [shape = 'u32[]', space=smem, size = 0x4, offset = 0x4, fixed_abs, tag = 'smem constant byte address 0x4 - core index']
  #allocation1 [shape = 'u32[144,128]{1,0:T(1,128)}', space=vmem, size = 0x12000, scoped, tag = 'internal scratch']
  #allocation2 [shape = 'f32[4,4,5,5]{3,2,1,0:T(8,128)}', space=vmem, size = 0x10000, scoped, tag = 'scratch operand']
  %s0 = inlined_call_operand.vmem [shape: f32[2,4,36,16], index: 0, kind: input, shape index: {}]
  %s1 = inlined_call_operand.vmem [shape: f32[8,36], index: 1, kind: input, shape index: {}]
  %s2 = inlined_call_operand.vmem [shape: f32[8,1], index: 2, kind: input, shape index: {}]
  %s3 = inlined_call_operand.vmem [shape: f32[4,8], index: 3, kind: input, shape index: {}]
  %s4 = inlined_call_operand.vmem [shape: f32[4,1], index: 4, kind: input, shape index: {}]
  %s5 = inlined_call_operand.vmem [shape: f32[8,36], index: 5, kind: input, shape index: {}]
  %s6 = inlined_call_operand.vmem [shape: f32[8,1], index: 6, kind: input, shape index: {}]
  %s7 = inlined_call_operand.vmem [shape: f32[8,16], index: 7, kind: input, shape index: {}]
  %s8 = inlined_call_operand.vmem [shape: f32[8,1], index: 8, kind: input, shape index: {}]
  %s9 = inlined_call_operand.vmem [shape: f32[2,8,16], index: 9, kind: output, shape index: {}]
  %s10 = sld [smem:[#allocation0]]
  $region69: #{stem_block_forward.1} parent=0
    _
  %s12 = ssub.s32 1, %s10
  %s13 = scalar_select 0, %s12, %s10
  loop: start=0, step=1, limit=4
  $region2: #{stem_block_forward.1} parent=0 // loop_pre_header
    _
  $region3: #{stem_block_forward.1} parent=0 // loop_header
    %s15 = sphi 0, %s19
    %p16 = scmp.ge.s32.totalorder %s15, 4
    %s25 = sphi 0, %s27
    %s28 = sphi 0, %s25
    %s29 = sphi 0, %s28
    %s45 = sphi 0, %s29
    %s49 = sphi 0, %s49
    %s51 = sphi 0, %s49
    %s52 = sphi 0, %s51
    %s66 = sphi 0, %s52
    %s70 = sphi 0, %s70
    %s72 = sphi 0, %s70
    %s73 = sphi 0, %s72
    %s87 = sphi 0, %s73
    %s91 = sphi 0, %s91
    %s93 = sphi 0, %s91
    %s94 = sphi 0, %s93
    %s108 = sphi 0, %s94
    %s112 = sphi 0, %s112
    %s114 = sphi 0, %s112
    %s115 = sphi 0, %s114
    %s129 = sphi 0, %s115
    %s133 = sphi 0, %s133
    %s135 = sphi 0, %s133
    %s136 = sphi 0, %s135
    %s150 = sphi 0, %s136
    %s154 = sphi 0, %s154
    %s156 = sphi 0, %s154
    %s157 = sphi 0, %s156
    %s171 = sphi 0, %s157
    %s175 = sphi 0, %s175
    %s177 = sphi 0, %s175
    %s178 = sphi 0, %s177
    %s192 = sphi 0, %s178
    %s196 = sphi 0, %s196
    %s198 = sphi 0, %s196
    %s199 = sphi 0, %s198
    %s213 = sphi 0, %s199
    %s219 = sphi 0, %s221
    %s222 = sphi 0, %s219
    %s223 = sphi 0, %s222
    %s239 = sphi 0, %s223
  $region4: #{stem_block_forward.1} parent=0 // loop_header_branch
    %18 = sbr.rel (%p16) target = $region8
  $region5: #{stem_block_forward.1} parent=0 // loop_body
    %s20 = ssub.s32 %s15, 1
    %s21 = ssub.s32 %s15, 2
    %s22 = sadd.s32 %s15, 1
    %s23 = ssub.s32 %s15, %s22
    %p24 = scmp.eq.s32.totalorder %s23, 0
    %s26 = sadd.s32 %s25, 1
    %s27 = scalar_select %p24, %s25, %s26
    %p30 = pneg %p24
    %p31 = scmp.eq.s32.totalorder %s15, 1
    %p32 = por %p30, %p31
    %p33 = scmp.ne.s32.totalorder %s25, %s28
    %p34 = scmp.eq.s32.totalorder %s15, 0
    %p35 = por %p33, %p34
    %p36 = scmp.ne.s32.totalorder %s25, %s28
    %p37 = scmp.eq.s32.totalorder %s20, 1
    %p38 = por %p36, %p37
    %p39 = scmp.ne.s32.totalorder %s28, %s29
    %p40 = scmp.eq.s32.totalorder %s20, 0
    %p41 = por %p39, %p40
    %p42 = scmp.ne.s32.totalorder %s28, %s29
    %p43 = scmp.eq.s32.totalorder %s21, 1
    %p44 = por %p42, %p43
    %p46 = scmp.ne.s32.totalorder %s29, %s45
    %p47 = scmp.eq.s32.totalorder %s21, 0
    %p48 = por %p46, %p47
    %s50 = sadd.s32 %s49, 1
    %p53 = scmp.eq.s32.totalorder %s15, 1
    %p54 = scmp.ne.s32.totalorder %s49, %s51
    %p55 = scmp.eq.s32.totalorder %s15, 0
    %p56 = por %p54, %p55
    %p57 = scmp.ne.s32.totalorder %s49, %s51
    %p58 = scmp.eq.s32.totalorder %s20, 1
    %p59 = por %p57, %p58
    %p60 = scmp.ne.s32.totalorder %s51, %s52
    %p61 = scmp.eq.s32.totalorder %s20, 0
    %p62 = por %p60, %p61
    %p63 = scmp.ne.s32.totalorder %s51, %s52
    %p64 = scmp.eq.s32.totalorder %s21, 1
    %p65 = por %p63, %p64
    %p67 = scmp.ne.s32.totalorder %s52, %s66
    %p68 = scmp.eq.s32.totalorder %s21, 0
    %p69 = por %p67, %p68
    %s71 = sadd.s32 %s70, 1
    %p74 = scmp.eq.s32.totalorder %s15, 1
    %p75 = scmp.ne.s32.totalorder %s70, %s72
    %p76 = scmp.eq.s32.totalorder %s15, 0
    %p77 = por %p75, %p76
    %p78 = scmp.ne.s32.totalorder %s70, %s72
    %p79 = scmp.eq.s32.totalorder %s20, 1
    %p80 = por %p78, %p79
    %p81 = scmp.ne.s32.totalorder %s72, %s73
    %p82 = scmp.eq.s32.totalorder %s20, 0
    %p83 = por %p81, %p82
    %p84 = scmp.ne.s32.totalorder %s72, %s73
    %p85 = scmp.eq.s32.totalorder %s21, 1
    %p86 = por %p84, %p85
    %p88 = scmp.ne.s32.totalorder %s73, %s87
    %p89 = scmp.eq.s32.totalorder %s21, 0
    %p90 = por %p88, %p89
    %s92 = sadd.s32 %s91, 1
    %p95 = scmp.eq.s32.totalorder %s15, 1
    %p96 = scmp.ne.s32.totalorder %s91, %s93
    %p97 = scmp.eq.s32.totalorder %s15, 0
    %p98 = por %p96, %p97
    %p99 = scmp.ne.s32.totalorder %s91, %s93
    %p100 = scmp.eq.s32.totalorder %s20, 1
    %p101 = por %p99, %p100
    %p102 = scmp.ne.s32.totalorder %s93, %s94
    %p103 = scmp.eq.s32.totalorder %s20, 0
    %p104 = por %p102, %p103
    %p105 = scmp.ne.s32.totalorder %s93, %s94
    %p106 = scmp.eq.s32.totalorder %s21, 1
    %p107 = por %p105, %p106
    %p109 = scmp.ne.s32.totalorder %s94, %s108
    %p110 = scmp.eq.s32.totalorder %s21, 0
    %p111 = por %p109, %p110
    %s113 = sadd.s32 %s112, 1
    %p116 = scmp.eq.s32.totalorder %s15, 1
    %p117 = scmp.ne.s32.totalorder %s112, %s114
    %p118 = scmp.eq.s32.totalorder %s15, 0
    %p119 = por %p117, %p118
    %p120 = scmp.ne.s32.totalorder %s112, %s114
    %p121 = scmp.eq.s32.totalorder %s20, 1
    %p122 = por %p120, %p121
    %p123 = scmp.ne.s32.totalorder %s114, %s115
    %p124 = scmp.eq.s32.totalorder %s20, 0
    %p125 = por %p123, %p124
    %p126 = scmp.ne.s32.totalorder %s114, %s115
    %p127 = scmp.eq.s32.totalorder %s21, 1
    %p128 = por %p126, %p127
    %p130 = scmp.ne.s32.totalorder %s115, %s129
    %p131 = scmp.eq.s32.totalorder %s21, 0
    %p132 = por %p130, %p131
    %s134 = sadd.s32 %s133, 1
    %p137 = scmp.eq.s32.totalorder %s15, 1
    %p138 = scmp.ne.s32.totalorder %s133, %s135
    %p139 = scmp.eq.s32.totalorder %s15, 0
    %p140 = por %p138, %p139
    %p141 = scmp.ne.s32.totalorder %s133, %s135
    %p142 = scmp.eq.s32.totalorder %s20, 1
    %p143 = por %p141, %p142
    %p144 = scmp.ne.s32.totalorder %s135, %s136
    %p145 = scmp.eq.s32.totalorder %s20, 0
    %p146 = por %p144, %p145
    %p147 = scmp.ne.s32.totalorder %s135, %s136
    %p148 = scmp.eq.s32.totalorder %s21, 1
    %p149 = por %p147, %p148
    %p151 = scmp.ne.s32.totalorder %s136, %s150
    %p152 = scmp.eq.s32.totalorder %s21, 0
    %p153 = por %p151, %p152
    %s155 = sadd.s32 %s154, 1
    %p158 = scmp.eq.s32.totalorder %s15, 1
    %p159 = scmp.ne.s32.totalorder %s154, %s156
    %p160 = scmp.eq.s32.totalorder %s15, 0
    %p161 = por %p159, %p160
    %p162 = scmp.ne.s32.totalorder %s154, %s156
    %p163 = scmp.eq.s32.totalorder %s20, 1
    %p164 = por %p162, %p163
    %p165 = scmp.ne.s32.totalorder %s156, %s157
    %p166 = scmp.eq.s32.totalorder %s20, 0
    %p167 = por %p165, %p166
    %p168 = scmp.ne.s32.totalorder %s156, %s157
    %p169 = scmp.eq.s32.totalorder %s21, 1
    %p170 = por %p168, %p169
    %p172 = scmp.ne.s32.totalorder %s157, %s171
    %p173 = scmp.eq.s32.totalorder %s21, 0
    %p174 = por %p172, %p173
    %s176 = sadd.s32 %s175, 1
    %p179 = scmp.eq.s32.totalorder %s15, 1
    %p180 = scmp.ne.s32.totalorder %s175, %s177
    %p181 = scmp.eq.s32.totalorder %s15, 0
    %p182 = por %p180, %p181
    %p183 = scmp.ne.s32.totalorder %s175, %s177
    %p184 = scmp.eq.s32.totalorder %s20, 1
    %p185 = por %p183, %p184
    %p186 = scmp.ne.s32.totalorder %s177, %s178
    %p187 = scmp.eq.s32.totalorder %s20, 0
    %p188 = por %p186, %p187
    %p189 = scmp.ne.s32.totalorder %s177, %s178
    %p190 = scmp.eq.s32.totalorder %s21, 1
    %p191 = por %p189, %p190
    %p193 = scmp.ne.s32.totalorder %s178, %s192
    %p194 = scmp.eq.s32.totalorder %s21, 0
    %p195 = por %p193, %p194
    %s197 = sadd.s32 %s196, 1
    %p200 = scmp.eq.s32.totalorder %s15, 1
    %p201 = scmp.ne.s32.totalorder %s196, %s198
    %p202 = scmp.eq.s32.totalorder %s15, 0
    %p203 = por %p201, %p202
    %p204 = scmp.ne.s32.totalorder %s196, %s198
    %p205 = scmp.eq.s32.totalorder %s20, 1
    %p206 = por %p204, %p205
    %p207 = scmp.ne.s32.totalorder %s198, %s199
    %p208 = scmp.eq.s32.totalorder %s20, 0
    %p209 = por %p207, %p208
    %p210 = scmp.ne.s32.totalorder %s198, %s199
    %p211 = scmp.eq.s32.totalorder %s21, 1
    %p212 = por %p210, %p211
    %p214 = scmp.ne.s32.totalorder %s199, %s213
    %p215 = scmp.eq.s32.totalorder %s21, 0
    %p216 = por %p214, %p215
    %s217 = ssub.s32 %s15, %s22
    %p218 = scmp.eq.s32.totalorder %s217, 0
    %s220 = sadd.s32 %s219, 1
    %s221 = scalar_select %p218, %s219, %s220
    %p224 = pneg %p218
    %p225 = scmp.eq.s32.totalorder %s15, 1
    %p226 = por %p224, %p225
    %p227 = scmp.ne.s32.totalorder %s219, %s222
    %p228 = scmp.eq.s32.totalorder %s15, 0
    %p229 = por %p227, %p228
    %p230 = scmp.ne.s32.totalorder %s219, %s222
    %p231 = scmp.eq.s32.totalorder %s20, 1
    %p232 = por %p230, %p231
    %p233 = scmp.ne.s32.totalorder %s222, %s223
    %p234 = scmp.eq.s32.totalorder %s20, 0
    %p235 = por %p233, %p234
    %p236 = scmp.ne.s32.totalorder %s222, %s223
    %p237 = scmp.eq.s32.totalorder %s21, 1
    %p238 = por %p236, %p237
    %p240 = scmp.ne.s32.totalorder %s223, %s239
    %p241 = scmp.eq.s32.totalorder %s21, 0
    %p242 = por %p240, %p241
    %p243 = scmp.le.s32.totalorder 1, %s15
    %p244 = scmp.lt.s32.totalorder %s15, 3
    %p245 = pnand %p243, %p244
    %p246 = pneg %p245
    // Predicated region
    $region9: #{stem_block_forward.1} parent=5 // pred_check
      _
    $region10: #{stem_block_forward.1} parent=5 // pred_check_branch
      %248 = sbr.rel (%p245) target = $region12
    $region11: #{stem_block_forward.1} parent=5 // pred_region
      %s249 = ssub.s32 %s15, 1
      // Predicated region
      $region13: #{stem_block_forward.1} parent=11 // pred_check
        %p250 = pneg %p62
      $region14: #{stem_block_forward.1} parent=11 // pred_check_branch
        %252 = sbr.rel (%p250) target = $region16
      $region15: #{stem_block_forward.1} parent=11 // pred_region
        _
      $region16: #{stem_block_forward.1} parent=11 // pred_fallthru
        _
      // Predicated region
      $region17: #{stem_block_forward.1} parent=11 // pred_check
        %p253 = pneg %p83
      $region18: #{stem_block_forward.1} parent=11 // pred_check_branch
        %255 = sbr.rel (%p253) target = $region20
      $region19: #{stem_block_forward.1} parent=11 // pred_region
        _
      $region20: #{stem_block_forward.1} parent=11 // pred_fallthru
        _
      // Predicated region
      $region21: #{stem_block_forward.1} parent=11 // pred_check
        %p256 = pneg %p104
      $region22: #{stem_block_forward.1} parent=11 // pred_check_branch
        %258 = sbr.rel (%p256) target = $region24
      $region23: #{stem_block_forward.1} parent=11 // pred_region
        _
      $region24: #{stem_block_forward.1} parent=11 // pred_fallthru
        _
      // Predicated region
      $region25: #{stem_block_forward.1} parent=11 // pred_check
        %p259 = pneg %p125
      $region26: #{stem_block_forward.1} parent=11 // pred_check_branch
        %261 = sbr.rel (%p259) target = $region28
      $region27: #{stem_block_forward.1} parent=11 // pred_region
        _
      $region28: #{stem_block_forward.1} parent=11 // pred_fallthru
        _
      // Predicated region
      $region29: #{stem_block_forward.1} parent=11 // pred_check
        %p262 = pneg %p146
      $region30: #{stem_block_forward.1} parent=11 // pred_check_branch
        %264 = sbr.rel (%p262) target = $region32
      $region31: #{stem_block_forward.1} parent=11 // pred_region
        _
      $region32: #{stem_block_forward.1} parent=11 // pred_fallthru
        _
      // Predicated region
      $region33: #{stem_block_forward.1} parent=11 // pred_check
        %p265 = pneg %p167
      $region34: #{stem_block_forward.1} parent=11 // pred_check_branch
        %267 = sbr.rel (%p265) target = $region36
      $region35: #{stem_block_forward.1} parent=11 // pred_region
        _
      $region36: #{stem_block_forward.1} parent=11 // pred_fallthru
        _
      // Predicated region
      $region37: #{stem_block_forward.1} parent=11 // pred_check
        %p268 = pneg %p188
      $region38: #{stem_block_forward.1} parent=11 // pred_check_branch
        %270 = sbr.rel (%p268) target = $region40
      $region39: #{stem_block_forward.1} parent=11 // pred_region
        _
      $region40: #{stem_block_forward.1} parent=11 // pred_fallthru
        _
      // Predicated region
      $region41: #{stem_block_forward.1} parent=11 // pred_check
        %p271 = pneg %p209
      $region42: #{stem_block_forward.1} parent=11 // pred_check_branch
        %273 = sbr.rel (%p271) target = $region44
      $region43: #{stem_block_forward.1} parent=11 // pred_region
        _
      $region44: #{stem_block_forward.1} parent=11 // pred_fallthru
        _
    $region12: #{stem_block_forward.1} parent=5 // pred_fallthru
      _
    %p274 = scmp.lt.s32.totalorder %s15, 2
    // Predicated region
    $region45: #{stem_block_forward.1} parent=5 // pred_check
      %p275 = pneg %p274
    $region46: #{stem_block_forward.1} parent=5 // pred_check_branch
      %277 = sbr.rel (%p275) target = $region48
    $region47: #{stem_block_forward.1} parent=5 // pred_region
      // Predicated region
      $region49: #{stem_block_forward.1} parent=47 // pred_check
        %p278 = pneg %p35
      $region50: #{stem_block_forward.1} parent=47 // pred_check_branch
        %280 = sbr.rel (%p278) target = $region52
      $region51: #{stem_block_forward.1} parent=47 // pred_region
        %p281 = scmp.lt.s32.totalorder %s15, 1
        %s282 = scalar_select %p281, %s15, 1
        %s283 = smul.addr %s282, 20
        %s284 = smul.addr %s283, 8
        %s285 = scalar_lea.vmem %s0, %s284
      $region52: #{stem_block_forward.1} parent=47 // pred_fallthru
        _
    $region48: #{stem_block_forward.1} parent=5 // pred_fallthru
      _
    %p286 = scmp.le.s32.totalorder 1, %s15
    %p287 = scmp.lt.s32.totalorder %s15, 3
    %p288 = pnand %p286, %p287
    %p289 = pneg %p288
    // Predicated region
    $region53: #{stem_block_forward.1} parent=5 // pred_check
      _
    $region54: #{stem_block_forward.1} parent=5 // pred_check_branch
      %291 = sbr.rel (%p288) target = $region56
    $region55: #{stem_block_forward.1} parent=5 // pred_region
      %s292 = ssub.s32 %s15, 1
      %p293 = scmp.lt.s32.totalorder %s20, 1
      %s294 = scalar_select %p293, %s20, 1
      %s295 = smul.addr %s294, 20
      %s296 = smul.addr %s295, 8
      %s297 = scalar_lea.vmem %s0, %s296
      %p298 = pneg %p41
      %p299 = pneg %p38
      %p300 = pneg %p62
      %p301 = pneg %p59
      %p302 = pneg %p83
      %p303 = pneg %p80
      %p304 = pneg %p104
      %p305 = pneg %p101
      %p306 = pneg %p125
      %p307 = pneg %p122
      %p308 = pneg %p146
      %p309 = pneg %p143
      %p310 = pneg %p167
      %p311 = pneg %p164
      %p312 = pneg %p188
      %p313 = pneg %p185
      %p314 = pneg %p209
      %p315 = pneg %p206
      %p316 = pneg %p235
      %p317 = pneg %p232
      %p318 = scmp.lt.s32.totalorder %s20, 1
      %s319 = scalar_select %p318, %s20, 1
      %s320 = smul.addr %s319, 8
      %s321 = scalar_lea.vmem %s9, %s320
      %p322 = scmp.lt.s32.totalorder %s20, 1
      %s323 = scalar_select %p322, %s20, 1
      %s324 = smul.addr %s323, 20
      %s325 = smul.addr %s324, 8
      %s326 = scalar_lea.vmem %s0, %s325
      %p327 = scmp.lt.s32.totalorder %s20, 1
      %s328 = scalar_select %p327, %s20, 1
      %s329 = smul.addr %s328, 8
      %s330 = scalar_lea.vmem %s9, %s329
      %v331 = vld [vmem:[%s326] sm:$0xff]
      %v332 = vld [vmem:[%s326 + $0x8] sm:$0xff]
      %v333 = vld [vmem:[%s326 + $0x10] sm:$0xff]
      %v334 = vld [vmem:[%s326 + $0x18] sm:$0xff]
      %v335 = vld [vmem:[%s326 + $0x20] sm:$0xf]
      %v336 = vld [vmem:[%s1] sm:$0xff]
      %v337 = vld [vmem:[%s2] sm:$0xff]
      %339 = vset.pattern.permute.xlu0 0
      %340 = vperm.xlu0 %339, %v337
      %v341 = vpop.permute.xlu0 %340
      %vm343 = vcmask 293888
      %v345 = vsel %vm343, %v336, 0
      %vm347 = vcmask 1043456
      %v349 = vsel %vm347, %v335, 0
      %351 = vmatprep.subr.mxu0 0.0
      %352 = vmatpush1.msra.mxu0 0.0
      %353 = vmatprep.subr.mxu0 0.0
      %354 = vmatpush1.msra.mxu0 0.0
      %355 = vmatprep.subr.mxu0 0.0
      %356 = vmatpush1.msra.mxu0 0.0
      %357 = vmatprep.subr.mxu0 0.0
      %358 = vmatpush1.msra.mxu0 0.0
      %359 = vmatprep.subr.mxu0 0.0
      %360 = vmatpush1.msra.mxu0 0.0
      %361 = vmatprep.subr.mxu0 0.0
      %362 = vmatpush1.msra.mxu0 0.0
      %363 = vmatprep.subr.mxu0 0.0
      %364 = vmatpush1.msra.mxu0 0.0
      %365 = vmatprep.subr.mxu0 0.0
      %366 = vmatpush1.msra.mxu0 0.0
      %367 = vmatprep.subr.mxu0 0.0
      %368 = vmatpush1.msra.mxu0 0.0
      %369 = vmatprep.subr.mxu0 0.0
      %370 = vmatpush1.msra.mxu0 0.0
      %371 = vmatprep.subr.mxu0 0.0
      %372 = vmatpush1.msra.mxu0 0.0
      %373 = vmatprep.subr.mxu0 0.0
      %374 = vmatpush1.msra.mxu0 %v349
      %375 = vmatprep.subr.mxu0 0.0
      %376 = vmatpush1.msra.mxu0 %v334
      %377 = vmatprep.subr.mxu0 0.0
      %378 = vmatpush1.msra.mxu0 %v333
      %379 = vmatprep.subr.mxu0 0.0
      %380 = vmatpush1.msra.mxu0 %v332
      %381 = vmatprep.subr.mxu0 0.0
      %382 = vmatpush1.msra.mxu0 %v331
      %383 = vmatprep.subr.mxu0 0.0
      %384 = vmatpush2.msra.mxu0 0.0
      %385 = vmatprep.subr.mxu0 0.0
      %386 = vmatpush2.msra.mxu0 0.0
      %387 = vmatprep.subr.mxu0 0.0
      %388 = vmatpush2.msra.mxu0 0.0
      %389 = vmatprep.subr.mxu0 0.0
      %390 = vmatpush2.msra.mxu0 0.0
      %391 = vmatprep.subr.mxu0 0.0
      %392 = vmatpush2.msra.mxu0 0.0
      %393 = vmatprep.subr.mxu0 0.0
      %394 = vmatpush2.msra.mxu0 0.0
      %395 = vmatprep.subr.mxu0 0.0
      %396 = vmatpush2.msra.mxu0 0.0
      %397 = vmatprep.subr.mxu0 0.0
      %398 = vmatpush2.msra.mxu0 0.0
      %399 = vmatprep.subr.mxu0 0.0
      %400 = vmatpush2.msra.mxu0 0.0
      %401 = vmatprep.subr.mxu0 0.0
      %402 = vmatpush2.msra.mxu0 0.0
      %403 = vmatprep.subr.mxu0 0.0
      %404 = vmatpush2.msra.mxu0 0.0
      %405 = vmatprep.subr.mxu0 0.0
      %406 = vmatpush2.msra.mxu0 0.0
      %407 = vmatprep.subr.mxu0 0.0
      %408 = vmatpush2.msra.mxu0 0.0
      %409 = vmatprep.subr.mxu0 0.0
      %410 = vmatpush2.msra.mxu0 0.0
      %411 = vmatprep.subr.mxu0 0.0
      %412 = vmatpush2.msra.mxu0 0.0
      %413 = vmatprep.subr.mxu0 0.0
      %414 = vmatpush2.msra.mxu0 0.0
      %415 = vmatprep.mubr.f32.mxu0 0.0
      %416 = vmatmul.mubr.f32.gmra.mxu0 %v345
      %v417 = vpop.f32.mrf.mxu0
      %v418 = vadd.f32 %v341, %v417
      %v419 = vpop.f32.mrf.mxu0
      %420 = vdwg.mxu0
      %v421 = vxor.u32 %v418, 2147483648
      %v422 = vmul.f32 %v421, 1.442695
      %v423 = vpow.pop %v422
      %v424 = vadd.f32 %v423, 1.0
      %v425 = vrcp.pop %v424
      %v426 = vmul.f32 1.0, %v425
      %v427 = vmul.f32 %v418, %v426
      %s428 = scalar_lea.vmem %s326, 40
      %v429 = vld [vmem:[%s428] sm:$0xff]
      %v430 = vld [vmem:[%s428 + $0x8] sm:$0xff]
      %v431 = vld [vmem:[%s428 + $0x10] sm:$0xff]
      %v432 = vld [vmem:[%s428 + $0x18] sm:$0xff]
      %v433 = vld [vmem:[%s428 + $0x20] sm:$0xf]
      %v435 = vsel %vm347, %v433, 0
      %437 = vmatprep.subr.mxu0 0.0
      %438 = vmatpush1.msra.mxu0 0.0
      %439 = vmatprep.subr.mxu0 0.0
      %440 = vmatpush1.msra.mxu0 0.0
      %441 = vmatprep.subr.mxu0 0.0
      %442 = vmatpush1.msra.mxu0 0.0
      %443 = vmatprep.subr.mxu0 0.0
      %444 = vmatpush1.msra.mxu0 0.0
      %445 = vmatprep.subr.mxu0 0.0
      %446 = vmatpush1.msra.mxu0 0.0
      %447 = vmatprep.subr.mxu0 0.0
      %448 = vmatpush1.msra.mxu0 0.0
      %449 = vmatprep.subr.mxu0 0.0
      %450 = vmatpush1.msra.mxu0 0.0
      %451 = vmatprep.subr.mxu0 0.0
      %452 = vmatpush1.msra.mxu0 0.0
      %453 = vmatprep.subr.mxu0 0.0
      %454 = vmatpush1.msra.mxu0 0.0
      %455 = vmatprep.subr.mxu0 0.0
      %456 = vmatpush1.msra.mxu0 0.0
      %457 = vmatprep.subr.mxu0 0.0
      %458 = vmatpush1.msra.mxu0 0.0
      %459 = vmatprep.subr.mxu0 0.0
      %460 = vmatpush1.msra.mxu0 %v435
      %461 = vmatprep.subr.mxu0 0.0
      %462 = vmatpush1.msra.mxu0 %v432
      %463 = vmatprep.subr.mxu0 0.0
      %464 = vmatpush1.msra.mxu0 %v431
      %465 = vmatprep.subr.mxu0 0.0
      %466 = vmatpush1.msra.mxu0 %v430
      %467 = vmatprep.subr.mxu0 0.0
      %468 = vmatpush1.msra.mxu0 %v429
      %469 = vmatprep.subr.mxu0 0.0
      %470 = vmatpush2.msra.mxu0 0.0
      %471 = vmatprep.subr.mxu0 0.0
      %472 = vmatpush2.msra.mxu0 0.0
      %473 = vmatprep.subr.mxu0 0.0
      %474 = vmatpush2.msra.mxu0 0.0
      %475 = vmatprep.subr.mxu0 0.0
      %476 = vmatpush2.msra.mxu0 0.0
      %477 = vmatprep.subr.mxu0 0.0
      %478 = vmatpush2.msra.mxu0 0.0
      %479 = vmatprep.subr.mxu0 0.0
      %480 = vmatpush2.msra.mxu0 0.0
      %481 = vmatprep.subr.mxu0 0.0
      %482 = vmatpush2.msra.mxu0 0.0
      %483 = vmatprep.subr.mxu0 0.0
      %484 = vmatpush2.msra.mxu0 0.0
      %485 = vmatprep.subr.mxu0 0.0
      %486 = vmatpush2.msra.mxu0 0.0
      %487 = vmatprep.subr.mxu0 0.0
      %488 = vmatpush2.msra.mxu0 0.0
      %489 = vmatprep.subr.mxu0 0.0
      %490 = vmatpush2.msra.mxu0 0.0
      %491 = vmatprep.subr.mxu0 0.0
      %492 = vmatpush2.msra.mxu0 0.0
      %493 = vmatprep.subr.mxu0 0.0
      %494 = vmatpush2.msra.mxu0 0.0
      %495 = vmatprep.subr.mxu0 0.0
      %496 = vmatpush2.msra.mxu0 0.0
      %497 = vmatprep.subr.mxu0 0.0
      %498 = vmatpush2.msra.mxu0 0.0
      %499 = vmatprep.subr.mxu0 0.0
      %500 = vmatpush2.msra.mxu0 0.0
      %501 = vmatprep.mubr.f32.mxu0 0.0
      %502 = vmatmul.mubr.f32.gmra.mxu0 %v345
      %v503 = vpop.f32.mrf.mxu0
      %v504 = vadd.f32 %v341, %v503
      %v505 = vpop.f32.mrf.mxu0
      %506 = vdwg.mxu0
      %v507 = vxor.u32 %v504, 2147483648
      %v508 = vmul.f32 %v507, 1.442695
      %v509 = vpow.pop %v508
      %v510 = vadd.f32 %v509, 1.0
      %v511 = vrcp.pop %v510
      %v512 = vmul.f32 1.0, %v511
      %v513 = vmul.f32 %v504, %v512
      %s514 = scalar_lea.vmem %s326, 80
      %v515 = vld [vmem:[%s514] sm:$0xff]
      %v516 = vld [vmem:[%s514 + $0x8] sm:$0xff]
      %v517 = vld [vmem:[%s514 + $0x10] sm:$0xff]
      %v518 = vld [vmem:[%s514 + $0x18] sm:$0xff]
      %v519 = vld [vmem:[%s514 + $0x20] sm:$0xf]
      %v521 = vsel %vm347, %v519, 0
      %523 = vmatprep.subr.mxu0 0.0
      %524 = vmatpush1.msra.mxu0 0.0
      %525 = vmatprep.subr.mxu0 0.0
      %526 = vmatpush1.msra.mxu0 0.0
      %527 = vmatprep.subr.mxu0 0.0
      %528 = vmatpush1.msra.mxu0 0.0
      %529 = vmatprep.subr.mxu0 0.0
      %530 = vmatpush1.msra.mxu0 0.0
      %531 = vmatprep.subr.mxu0 0.0
      %532 = vmatpush1.msra.mxu0 0.0
      %533 = vmatprep.subr.mxu0 0.0
      %534 = vmatpush1.msra.mxu0 0.0
      %535 = vmatprep.subr.mxu0 0.0
      %536 = vmatpush1.msra.mxu0 0.0
      %537 = vmatprep.subr.mxu0 0.0
      %538 = vmatpush1.msra.mxu0 0.0
      %539 = vmatprep.subr.mxu0 0.0
      %540 = vmatpush1.msra.mxu0 0.0
      %541 = vmatprep.subr.mxu0 0.0
      %542 = vmatpush1.msra.mxu0 0.0
      %543 = vmatprep.subr.mxu0 0.0
      %544 = vmatpush1.msra.mxu0 0.0
      %545 = vmatprep.subr.mxu0 0.0
      %546 = vmatpush1.msra.mxu0 %v521
      %547 = vmatprep.subr.mxu0 0.0
      %548 = vmatpush1.msra.mxu0 %v518
      %549 = vmatprep.subr.mxu0 0.0
      %550 = vmatpush1.msra.mxu0 %v517
      %551 = vmatprep.subr.mxu0 0.0
      %552 = vmatpush1.msra.mxu0 %v516
      %553 = vmatprep.subr.mxu0 0.0
      %554 = vmatpush1.msra.mxu0 %v515
      %555 = vmatprep.subr.mxu0 0.0
      %556 = vmatpush2.msra.mxu0 0.0
      %557 = vmatprep.subr.mxu0 0.0
      %558 = vmatpush2.msra.mxu0 0.0
      %559 = vmatprep.subr.mxu0 0.0
      %560 = vmatpush2.msra.mxu0 0.0
      %561 = vmatprep.subr.mxu0 0.0
      %562 = vmatpush2.msra.mxu0 0.0
      %563 = vmatprep.subr.mxu0 0.0
      %564 = vmatpush2.msra.mxu0 0.0
      %565 = vmatprep.subr.mxu0 0.0
      %566 = vmatpush2.msra.mxu0 0.0
      %567 = vmatprep.subr.mxu0 0.0
      %568 = vmatpush2.msra.mxu0 0.0
      %569 = vmatprep.subr.mxu0 0.0
      %570 = vmatpush2.msra.mxu0 0.0
      %571 = vmatprep.subr.mxu0 0.0
      %572 = vmatpush2.msra.mxu0 0.0
      %573 = vmatprep.subr.mxu0 0.0
      %574 = vmatpush2.msra.mxu0 0.0
      %575 = vmatprep.subr.mxu0 0.0
      %576 = vmatpush2.msra.mxu0 0.0
      %577 = vmatprep.subr.mxu0 0.0
      %578 = vmatpush2.msra.mxu0 0.0
      %579 = vmatprep.subr.mxu0 0.0
      %580 = vmatpush2.msra.mxu0 0.0
      %581 = vmatprep.subr.mxu0 0.0
      %582 = vmatpush2.msra.mxu0 0.0
      %583 = vmatprep.subr.mxu0 0.0
      %584 = vmatpush2.msra.mxu0 0.0
      %585 = vmatprep.subr.mxu0 0.0
      %586 = vmatpush2.msra.mxu0 0.0
      %587 = vmatprep.mubr.f32.mxu0 0.0
      %588 = vmatmul.mubr.f32.gmra.mxu0 %v345
      %v589 = vpop.f32.mrf.mxu0
      %v590 = vadd.f32 %v341, %v589
      %v591 = vpop.f32.mrf.mxu0
      %592 = vdwg.mxu0
      %v593 = vxor.u32 %v590, 2147483648
      %v594 = vmul.f32 %v593, 1.442695
      %v595 = vpow.pop %v594
      %v596 = vadd.f32 %v595, 1.0
      %v597 = vrcp.pop %v596
      %v598 = vmul.f32 1.0, %v597
      %v599 = vmul.f32 %v590, %v598
      %s600 = scalar_lea.vmem %s326, 120
      %v601 = vld [vmem:[%s600] sm:$0xff]
      %v602 = vld [vmem:[%s600 + $0x8] sm:$0xff]
      %v603 = vld [vmem:[%s600 + $0x10] sm:$0xff]
      %v604 = vld [vmem:[%s600 + $0x18] sm:$0xff]
      %v605 = vld [vmem:[%s600 + $0x20] sm:$0xf]
      %v607 = vsel %vm347, %v605, 0
      %609 = vmatprep.subr.mxu0 0.0
      %610 = vmatpush1.msra.mxu0 0.0
      %611 = vmatprep.subr.mxu0 0.0
      %612 = vmatpush1.msra.mxu0 0.0
      %613 = vmatprep.subr.mxu0 0.0
      %614 = vmatpush1.msra.mxu0 0.0
      %615 = vmatprep.subr.mxu0 0.0
      %616 = vmatpush1.msra.mxu0 0.0
      %617 = vmatprep.subr.mxu0 0.0
      %618 = vmatpush1.msra.mxu0 0.0
      %619 = vmatprep.subr.mxu0 0.0
      %620 = vmatpush1.msra.mxu0 0.0
      %621 = vmatprep.subr.mxu0 0.0
      %622 = vmatpush1.msra.mxu0 0.0
      %623 = vmatprep.subr.mxu0 0.0
      %624 = vmatpush1.msra.mxu0 0.0
      %625 = vmatprep.subr.mxu0 0.0
      %626 = vmatpush1.msra.mxu0 0.0
      %627 = vmatprep.subr.mxu0 0.0
      %628 = vmatpush1.msra.mxu0 0.0
      %629 = vmatprep.subr.mxu0 0.0
      %630 = vmatpush1.msra.mxu0 0.0
      %631 = vmatprep.subr.mxu0 0.0
      %632 = vmatpush1.msra.mxu0 %v607
      %633 = vmatprep.subr.mxu0 0.0
      %634 = vmatpush1.msra.mxu0 %v604
      %635 = vmatprep.subr.mxu0 0.0
      %636 = vmatpush1.msra.mxu0 %v603
      %637 = vmatprep.subr.mxu0 0.0
      %638 = vmatpush1.msra.mxu0 %v602
      %639 = vmatprep.subr.mxu0 0.0
      %640 = vmatpush1.msra.mxu0 %v601
      %641 = vmatprep.subr.mxu0 0.0
      %642 = vmatpush2.msra.mxu0 0.0
      %643 = vmatprep.subr.mxu0 0.0
      %644 = vmatpush2.msra.mxu0 0.0
      %645 = vmatprep.subr.mxu0 0.0
      %646 = vmatpush2.msra.mxu0 0.0
      %647 = vmatprep.subr.mxu0 0.0
      %648 = vmatpush2.msra.mxu0 0.0
      %649 = vmatprep.subr.mxu0 0.0
      %650 = vmatpush2.msra.mxu0 0.0
      %651 = vmatprep.subr.mxu0 0.0
      %652 = vmatpush2.msra.mxu0 0.0
      %653 = vmatprep.subr.mxu0 0.0
      %654 = vmatpush2.msra.mxu0 0.0
      %655 = vmatprep.subr.mxu0 0.0
      %656 = vmatpush2.msra.mxu0 0.0
      %657 = vmatprep.subr.mxu0 0.0
      %658 = vmatpush2.msra.mxu0 0.0
      %659 = vmatprep.subr.mxu0 0.0
      %660 = vmatpush2.msra.mxu0 0.0
      %661 = vmatprep.subr.mxu0 0.0
      %662 = vmatpush2.msra.mxu0 0.0
      %663 = vmatprep.subr.mxu0 0.0
      %664 = vmatpush2.msra.mxu0 0.0
      %665 = vmatprep.subr.mxu0 0.0
      %666 = vmatpush2.msra.mxu0 0.0
      %667 = vmatprep.subr.mxu0 0.0
      %668 = vmatpush2.msra.mxu0 0.0
      %669 = vmatprep.subr.mxu0 0.0
      %670 = vmatpush2.msra.mxu0 0.0
      %671 = vmatprep.subr.mxu0 0.0
      %672 = vmatpush2.msra.mxu0 0.0
      %673 = vmatprep.mubr.f32.mxu0 0.0
      %674 = vmatmul.mubr.f32.gmra.mxu0 %v345
      %v675 = vpop.f32.mrf.mxu0
      %v676 = vadd.f32 %v341, %v675
      %v677 = vpop.f32.mrf.mxu0
      %678 = vdwg.mxu0
      %v679 = vxor.u32 %v676, 2147483648
      %v680 = vmul.f32 %v679, 1.442695
      %v681 = vpow.pop %v680
      %v682 = vadd.f32 %v681, 1.0
      %v683 = vrcp.pop %v682
      %v684 = vmul.f32 1.0, %v683
      %v685 = vmul.f32 %v676, %v684
      %v686 = vmax.f32 %v427, %v513
      %v687 = vmax.f32 %v599, %v685
      %v688 = vmax.f32 %v686, %v687
      %vm689 = vcmask 32768
      %690 = vst.msk [vmem:[#allocation2] sm:$0x1] %vm689, 0.0
      %691 = vst.msk [vmem:[#allocation2 + $0x8] sm:$0x1] %vm689, 0.0
      %692 = vst.msk [vmem:[#allocation2 + $0x10] sm:$0x1] %vm689, 0.0
      %693 = vst.msk [vmem:[#allocation2 + $0x18] sm:$0x1] %vm689, 0.0
      %694 = vst.msk [vmem:[#allocation2 + $0x20] sm:$0x1] %vm689, 0.0
      %695 = vst.msk [vmem:[#allocation2 + $0x28] sm:$0x1] %vm689, 0.0
      %696 = vst.msk [vmem:[#allocation2 + $0x30] sm:$0x1] %vm689, 0.0
      %697 = vst.msk [vmem:[#allocation2 + $0x38] sm:$0x1] %vm689, 0.0
      %698 = vst.msk [vmem:[#allocation2 + $0x40] sm:$0x1] %vm689, 0.0
      %699 = vst.msk [vmem:[#allocation2 + $0x48] sm:$0x1] %vm689, 0.0
      %700 = vst.msk [vmem:[#allocation2 + $0x50] sm:$0x1] %vm689, 0.0
      %701 = vst.msk [vmem:[#allocation2 + $0x58] sm:$0x1] %vm689, 0.0
      %702 = vst.msk [vmem:[#allocation2 + $0x60] sm:$0x1] %vm689, 0.0
      %703 = vst.msk [vmem:[#allocation2 + $0x68] sm:$0x1] %vm689, 0.0
      %704 = vst.msk [vmem:[#allocation2 + $0x70] sm:$0x1] %vm689, 0.0
      %705 = vst.msk [vmem:[#allocation2 + $0x78] sm:$0x1] %vm689, 0.0
      %vm706 = vcmask 4096
      %707 = vst.msk [vmem:[#allocation2] sm:$0x1f] %vm706, 0.0
      %708 = vst.msk [vmem:[#allocation2 + $0x8] sm:$0x1f] %vm706, 0.0
      %709 = vst.msk [vmem:[#allocation2 + $0x10] sm:$0x1f] %vm706, 0.0
      %710 = vst.msk [vmem:[#allocation2 + $0x18] sm:$0x1f] %vm706, 0.0
      %711 = vst.msk [vmem:[#allocation2 + $0x20] sm:$0x1f] %vm706, 0.0
      %712 = vst.msk [vmem:[#allocation2 + $0x28] sm:$0x1f] %vm706, 0.0
      %713 = vst.msk [vmem:[#allocation2 + $0x30] sm:$0x1f] %vm706, 0.0
      %714 = vst.msk [vmem:[#allocation2 + $0x38] sm:$0x1f] %vm706, 0.0
      %715 = vst.msk [vmem:[#allocation2 + $0x40] sm:$0x1f] %vm706, 0.0
      %716 = vst.msk [vmem:[#allocation2 + $0x48] sm:$0x1f] %vm706, 0.0
      %717 = vst.msk [vmem:[#allocation2 + $0x50] sm:$0x1f] %vm706, 0.0
      %718 = vst.msk [vmem:[#allocation2 + $0x58] sm:$0x1f] %vm706, 0.0
      %719 = vst.msk [vmem:[#allocation2 + $0x60] sm:$0x1f] %vm706, 0.0
      %720 = vst.msk [vmem:[#allocation2 + $0x68] sm:$0x1f] %vm706, 0.0
      %721 = vst.msk [vmem:[#allocation2 + $0x70] sm:$0x1f] %vm706, 0.0
      %722 = vst.msk [vmem:[#allocation2 + $0x78] sm:$0x1f] %vm706, 0.0
      %v723 = vld [vmem:[%s3] sm:$0xf]
      %v724 = vld [vmem:[%s4] sm:$0xf]
      %726 = vset.pattern.permute.xlu0 0
      %727 = vperm.xlu0 %726, %v724
      %v728 = vpop.permute.xlu0 %727
      %vm730 = vcmask 64512
      %v732 = vsel %vm730, %v723, 0
      %734 = vmatprep.subr.mxu0 0.0
      %735 = vmatpush1.msra.mxu0 0.0
      %736 = vmatprep.subr.mxu0 0.0
      %737 = vmatpush1.msra.mxu0 0.0
      %738 = vmatprep.subr.mxu0 0.0
      %739 = vmatpush1.msra.mxu0 0.0
      %740 = vmatprep.subr.mxu0 0.0
      %741 = vmatpush1.msra.mxu0 0.0
      %742 = vmatprep.subr.mxu0 0.0
      %743 = vmatpush1.msra.mxu0 0.0
      %744 = vmatprep.subr.mxu0 0.0
      %745 = vmatpush1.msra.mxu0 0.0
      %746 = vmatprep.subr.mxu0 0.0
      %747 = vmatpush1.msra.mxu0 0.0
      %748 = vmatprep.subr.mxu0 0.0
      %749 = vmatpush1.msra.mxu0 0.0
      %750 = vmatprep.subr.mxu0 0.0
      %751 = vmatpush1.msra.mxu0 0.0
      %752 = vmatprep.subr.mxu0 0.0
      %753 = vmatpush1.msra.mxu0 0.0
      %754 = vmatprep.subr.mxu0 0.0
      %755 = vmatpush1.msra.mxu0 0.0
      %756 = vmatprep.subr.mxu0 0.0
      %757 = vmatpush1.msra.mxu0 0.0
      %758 = vmatprep.subr.mxu0 0.0
      %759 = vmatpush1.msra.mxu0 0.0
      %760 = vmatprep.subr.mxu0 0.0
      %761 = vmatpush1.msra.mxu0 0.0
      %762 = vmatprep.subr.mxu0 0.0
      %763 = vmatpush1.msra.mxu0 0.0
      %764 = vmatprep.subr.mxu0 0.0
      %765 = vmatpush1.msra.mxu0 %v427
      %766 = vmatprep.subr.mxu0 0.0
      %767 = vmatpush2.msra.mxu0 0.0
      %768 = vmatprep.subr.mxu0 0.0
      %769 = vmatpush2.msra.mxu0 0.0
      %770 = vmatprep.subr.mxu0 0.0
      %771 = vmatpush2.msra.mxu0 0.0
      %772 = vmatprep.subr.mxu0 0.0
      %773 = vmatpush2.msra.mxu0 0.0
      %774 = vmatprep.subr.mxu0 0.0
      %775 = vmatpush2.msra.mxu0 0.0
      %776 = vmatprep.subr.mxu0 0.0
      %777 = vmatpush2.msra.mxu0 0.0
      %778 = vmatprep.subr.mxu0 0.0
      %779 = vmatpush2.msra.mxu0 0.0
      %780 = vmatprep.subr.mxu0 0.0
      %781 = vmatpush2.msra.mxu0 0.0
      %782 = vmatprep.subr.mxu0 0.0
      %783 = vmatpush2.msra.mxu0 0.0
      %784 = vmatprep.subr.mxu0 0.0
      %785 = vmatpush2.msra.mxu0 0.0
      %786 = vmatprep.subr.mxu0 0.0
      %787 = vmatpush2.msra.mxu0 0.0
      %788 = vmatprep.subr.mxu0 0.0
      %789 = vmatpush2.msra.mxu0 0.0
      %790 = vmatprep.subr.mxu0 0.0
      %791 = vmatpush2.msra.mxu0 0.0
      %792 = vmatprep.subr.mxu0 0.0
      %793 = vmatpush2.msra.mxu0 0.0
      %794 = vmatprep.subr.mxu0 0.0
      %795 = vmatpush2.msra.mxu0 0.0
      %796 = vmatprep.subr.mxu0 0.0
      %797 = vmatpush2.msra.mxu0 0.0
      %798 = vmatprep.mubr.f32.mxu0 0.0
      %799 = vmatmul.mubr.f32.gmra.mxu0 %v732
      %v800 = vpop.f32.mrf.mxu0
      %v801 = vadd.f32 %v728, %v800
      %v802 = vpop.f32.mrf.mxu0
      %803 = vdwg.mxu0
      %v804 = vxor.u32 %v801, 2147483648
      %v805 = vmul.f32 %v804, 1.442695
      %v806 = vpow.pop %v805
      %v807 = vadd.f32 %v806, 1.0
      %v808 = vrcp.pop %v807
      %v809 = vmul.f32 1.0, %v808
      %v810 = vmul.f32 %v801, %v809
      %812 = vrot.lane.b32.xlu0 %v810, 124
      %v813 = vpop.permute.xlu0 %812
      %815 = vrot.lane.b32.xlu0 %v810, 120
      %v816 = vpop.permute.xlu0 %815
      %818 = vrot.lane.b32.xlu0 %v810, 116
      %v819 = vpop.permute.xlu0 %818
      %v821 = vcombine.low %v810, %v816
      %v823 = vunpack.c.l.s4 1983009808
      %v824 = vunpack.c.0.s8 %v823
      %v825 = vlaneseq
      %v826 = vshrl.u32 %v825, 7
      %v827 = vsub.s32 %v824, %v826
      %v828 = vrot.slane %v821, %v827
      %v829 = vcombine.low %v813, %v819
      %v831 = vunpack.c.l.s4 1983009808
      %v832 = vunpack.c.0.s8 %v831
      %v833 = vlaneseq
      %v834 = vshrl.u32 %v833, 7
      %v835 = vsub.s32 %v832, %v834
      %v836 = vrot.slane %v829, %v835
      %v837 = vcombine.low %v828, %v836
      %v838 = vcombine.high %v828, %v836
      %v840 = vunpack.c.l.s4 1934713408
      %v841 = vunpack.c.0.s8 %v840
      %v842 = vlaneseq
      %v843 = vshrl.u32 %v842, 7
      %v844 = vsub.s32 %v841, %v843
      %v845 = vrot.slane %v837, %v844
      %v847 = vunpack.c.l.s4 1934713408
      %v848 = vunpack.c.0.s8 %v847
      %v849 = vlaneseq
      %v850 = vshrl.u32 %v849, 7
      %v851 = vsub.s32 %v848, %v850
      %v852 = vrot.slane %v838, %v851
      %v853 = vcombine.high %v845, 0.0
      %v854 = vcombine.high %v852, 0.0
      %859 = vrot.lane.b32.xlu0 %v845, 1
      %v860 = vpop.permute.xlu0 %859
      %861 = vrot.lane.b32.xlu0 %v853, 1
      %v862 = vpop.permute.xlu0 %861
      %863 = vrot.lane.b32.xlu0 %v852, 1
      %v864 = vpop.permute.xlu0 %863
      %865 = vrot.lane.b32.xlu0 %v854, 1
      %v866 = vpop.permute.xlu0 %865
      %vm871 = vcmask 35848
      %872 = vst.msk [vmem:[#allocation2 + $0x1] sm:$0xf] %vm871, %v860
      %873 = vst.msk [vmem:[#allocation2 + $0x9] sm:$0xf] %vm871, %v862
      %874 = vst.msk [vmem:[#allocation2 + $0x11] sm:$0xf] %vm871, %v864
      %875 = vst.msk [vmem:[#allocation2 + $0x19] sm:$0xf] %vm871, %v866
      %v876 = vld [vmem:[%s3] sm:$0xf]
      %v877 = vld [vmem:[%s4] sm:$0xf]
      %879 = vset.pattern.permute.xlu0 0
      %880 = vperm.xlu0 %879, %v877
      %v881 = vpop.permute.xlu0 %880
      %v884 = vsel %vm730, %v876, 0
      %886 = vmatprep.subr.mxu0 0.0
      %887 = vmatpush1.msra.mxu0 0.0
      %888 = vmatprep.subr.mxu0 0.0
      %889 = vmatpush1.msra.mxu0 0.0
      %890 = vmatprep.subr.mxu0 0.0
      %891 = vmatpush1.msra.mxu0 0.0
      %892 = vmatprep.subr.mxu0 0.0
      %893 = vmatpush1.msra.mxu0 0.0
      %894 = vmatprep.subr.mxu0 0.0
      %895 = vmatpush1.msra.mxu0 0.0
      %896 = vmatprep.subr.mxu0 0.0
      %897 = vmatpush1.msra.mxu0 0.0
      %898 = vmatprep.subr.mxu0 0.0
      %899 = vmatpush1.msra.mxu0 0.0
      %900 = vmatprep.subr.mxu0 0.0
      %901 = vmatpush1.msra.mxu0 0.0
      %902 = vmatprep.subr.mxu0 0.0
      %903 = vmatpush1.msra.mxu0 0.0
      %904 = vmatprep.subr.mxu0 0.0
      %905 = vmatpush1.msra.mxu0 0.0
      %906 = vmatprep.subr.mxu0 0.0
      %907 = vmatpush1.msra.mxu0 0.0
      %908 = vmatprep.subr.mxu0 0.0
      %909 = vmatpush1.msra.mxu0 0.0
      %910 = vmatprep.subr.mxu0 0.0
      %911 = vmatpush1.msra.mxu0 0.0
      %912 = vmatprep.subr.mxu0 0.0
      %913 = vmatpush1.msra.mxu0 0.0
      %914 = vmatprep.subr.mxu0 0.0
      %915 = vmatpush1.msra.mxu0 0.0
      %916 = vmatprep.subr.mxu0 0.0
      %917 = vmatpush1.msra.mxu0 %v513
      %918 = vmatprep.subr.mxu0 0.0
      %919 = vmatpush2.msra.mxu0 0.0
      %920 = vmatprep.subr.mxu0 0.0
      %921 = vmatpush2.msra.mxu0 0.0
      %922 = vmatprep.subr.mxu0 0.0
      %923 = vmatpush2.msra.mxu0 0.0
      %924 = vmatprep.subr.mxu0 0.0
      %925 = vmatpush2.msra.mxu0 0.0
      %926 = vmatprep.subr.mxu0 0.0
      %927 = vmatpush2.msra.mxu0 0.0
      %928 = vmatprep.subr.mxu0 0.0
      %929 = vmatpush2.msra.mxu0 0.0
      %930 = vmatprep.subr.mxu0 0.0
      %931 = vmatpush2.msra.mxu0 0.0
      %932 = vmatprep.subr.mxu0 0.0
      %933 = vmatpush2.msra.mxu0 0.0
      %934 = vmatprep.subr.mxu0 0.0
      %935 = vmatpush2.msra.mxu0 0.0
      %936 = vmatprep.subr.mxu0 0.0
      %937 = vmatpush2.msra.mxu0 0.0
      %938 = vmatprep.subr.mxu0 0.0
      %939 = vmatpush2.msra.mxu0 0.0
      %940 = vmatprep.subr.mxu0 0.0
      %941 = vmatpush2.msra.mxu0 0.0
      %942 = vmatprep.subr.mxu0 0.0
      %943 = vmatpush2.msra.mxu0 0.0
      %944 = vmatprep.subr.mxu0 0.0
      %945 = vmatpush2.msra.mxu0 0.0
      %946 = vmatprep.subr.mxu0 0.0
      %947 = vmatpush2.msra.mxu0 0.0
      %948 = vmatprep.subr.mxu0 0.0
      %949 = vmatpush2.msra.mxu0 0.0
      %950 = vmatprep.mubr.f32.mxu0 0.0
      %951 = vmatmul.mubr.f32.gmra.mxu0 %v884
      %v952 = vpop.f32.mrf.mxu0
      %v953 = vadd.f32 %v881, %v952
      %v954 = vpop.f32.mrf.mxu0
      %955 = vdwg.mxu0
      %v956 = vxor.u32 %v953, 2147483648
      %v957 = vmul.f32 %v956, 1.442695
      %v958 = vpow.pop %v957
      %v959 = vadd.f32 %v958, 1.0
      %v960 = vrcp.pop %v959
      %v961 = vmul.f32 1.0, %v960
      %v962 = vmul.f32 %v953, %v961
      %964 = vrot.lane.b32.xlu0 %v962, 124
      %v965 = vpop.permute.xlu0 %964
      %967 = vrot.lane.b32.xlu0 %v962, 120
      %v968 = vpop.permute.xlu0 %967
      %970 = vrot.lane.b32.xlu0 %v962, 116
      %v971 = vpop.permute.xlu0 %970
      %v973 = vcombine.low %v962, %v968
      %v975 = vunpack.c.l.s4 1983009808
      %v976 = vunpack.c.0.s8 %v975
      %v977 = vlaneseq
      %v978 = vshrl.u32 %v977, 7
      %v979 = vsub.s32 %v976, %v978
      %v980 = vrot.slane %v973, %v979
      %v981 = vcombine.low %v965, %v971
      %v983 = vunpack.c.l.s4 1983009808
      %v984 = vunpack.c.0.s8 %v983
      %v985 = vlaneseq
      %v986 = vshrl.u32 %v985, 7
      %v987 = vsub.s32 %v984, %v986
      %v988 = vrot.slane %v981, %v987
      %v989 = vcombine.low %v980, %v988
      %v990 = vcombine.high %v980, %v988
      %v992 = vunpack.c.l.s4 1934713408
      %v993 = vunpack.c.0.s8 %v992
      %v994 = vlaneseq
      %v995 = vshrl.u32 %v994, 7
      %v996 = vsub.s32 %v993, %v995
      %v997 = vrot.slane %v989, %v996
      %v999 = vunpack.c.l.s4 1934713408
      %v1000 = vunpack.c.0.s8 %v999
      %v1001 = vlaneseq
      %v1002 = vshrl.u32 %v1001, 7
      %v1003 = vsub.s32 %v1000, %v1002
      %v1004 = vrot.slane %v990, %v1003
      %v1005 = vcombine.high %v997, 0.0
      %v1006 = vcombine.high %v1004, 0.0
      %1011 = vrot.lane.b32.xlu0 %v997, 1
      %v1012 = vpop.permute.xlu0 %1011
      %1013 = vrot.lane.b32.xlu0 %v1005, 1
      %v1014 = vpop.permute.xlu0 %1013
      %1015 = vrot.lane.b32.xlu0 %v1004, 1
      %v1016 = vpop.permute.xlu0 %1015
      %1017 = vrot.lane.b32.xlu0 %v1006, 1
      %v1018 = vpop.permute.xlu0 %1017
      %s1023 = scalar_lea.vmem [#allocation2], 32
      %1024 = vst.msk [vmem:[%s1023 + $0x1] sm:$0xf] %vm871, %v1012
      %1025 = vst.msk [vmem:[%s1023 + $0x9] sm:$0xf] %vm871, %v1014
      %1026 = vst.msk [vmem:[%s1023 + $0x11] sm:$0xf] %vm871, %v1016
      %1027 = vst.msk [vmem:[%s1023 + $0x19] sm:$0xf] %vm871, %v1018
      %v1028 = vld [vmem:[%s3] sm:$0xf]
      %v1029 = vld [vmem:[%s4] sm:$0xf]
      %1031 = vset.pattern.permute.xlu0 0
      %1032 = vperm.xlu0 %1031, %v1029
      %v1033 = vpop.permute.xlu0 %1032
      %v1036 = vsel %vm730, %v1028, 0
      %1038 = vmatprep.subr.mxu0 0.0
      %1039 = vmatpush1.msra.mxu0 0.0
      %1040 = vmatprep.subr.mxu0 0.0
      %1041 = vmatpush1.msra.mxu0 0.0
      %1042 = vmatprep.subr.mxu0 0.0
      %1043 = vmatpush1.msra.mxu0 0.0
      %1044 = vmatprep.subr.mxu0 0.0
      %1045 = vmatpush1.msra.mxu0 0.0
      %1046 = vmatprep.subr.mxu0 0.0
      %1047 = vmatpush1.msra.mxu0 0.0
      %1048 = vmatprep.subr.mxu0 0.0
      %1049 = vmatpush1.msra.mxu0 0.0
      %1050 = vmatprep.subr.mxu0 0.0
      %1051 = vmatpush1.msra.mxu0 0.0
      %1052 = vmatprep.subr.mxu0 0.0
      %1053 = vmatpush1.msra.mxu0 0.0
      %1054 = vmatprep.subr.mxu0 0.0
      %1055 = vmatpush1.msra.mxu0 0.0
      %1056 = vmatprep.subr.mxu0 0.0
      %1057 = vmatpush1.msra.mxu0 0.0
      %1058 = vmatprep.subr.mxu0 0.0
      %1059 = vmatpush1.msra.mxu0 0.0
      %1060 = vmatprep.subr.mxu0 0.0
      %1061 = vmatpush1.msra.mxu0 0.0
      %1062 = vmatprep.subr.mxu0 0.0
      %1063 = vmatpush1.msra.mxu0 0.0
      %1064 = vmatprep.subr.mxu0 0.0
      %1065 = vmatpush1.msra.mxu0 0.0
      %1066 = vmatprep.subr.mxu0 0.0
      %1067 = vmatpush1.msra.mxu0 0.0
      %1068 = vmatprep.subr.mxu0 0.0
      %1069 = vmatpush1.msra.mxu0 %v599
      %1070 = vmatprep.subr.mxu0 0.0
      %1071 = vmatpush2.msra.mxu0 0.0
      %1072 = vmatprep.subr.mxu0 0.0
      %1073 = vmatpush2.msra.mxu0 0.0
      %1074 = vmatprep.subr.mxu0 0.0
      %1075 = vmatpush2.msra.mxu0 0.0
      %1076 = vmatprep.subr.mxu0 0.0
      %1077 = vmatpush2.msra.mxu0 0.0
      %1078 = vmatprep.subr.mxu0 0.0
      %1079 = vmatpush2.msra.mxu0 0.0
      %1080 = vmatprep.subr.mxu0 0.0
      %1081 = vmatpush2.msra.mxu0 0.0
      %1082 = vmatprep.subr.mxu0 0.0
      %1083 = vmatpush2.msra.mxu0 0.0
      %1084 = vmatprep.subr.mxu0 0.0
      %1085 = vmatpush2.msra.mxu0 0.0
      %1086 = vmatprep.subr.mxu0 0.0
      %1087 = vmatpush2.msra.mxu0 0.0
      %1088 = vmatprep.subr.mxu0 0.0
      %1089 = vmatpush2.msra.mxu0 0.0
      %1090 = vmatprep.subr.mxu0 0.0
      %1091 = vmatpush2.msra.mxu0 0.0
      %1092 = vmatprep.subr.mxu0 0.0
      %1093 = vmatpush2.msra.mxu0 0.0
      %1094 = vmatprep.subr.mxu0 0.0
      %1095 = vmatpush2.msra.mxu0 0.0
      %1096 = vmatprep.subr.mxu0 0.0
      %1097 = vmatpush2.msra.mxu0 0.0
      %1098 = vmatprep.subr.mxu0 0.0
      %1099 = vmatpush2.msra.mxu0 0.0
      %1100 = vmatprep.subr.mxu0 0.0
      %1101 = vmatpush2.msra.mxu0 0.0
      %1102 = vmatprep.mubr.f32.mxu0 0.0
      %1103 = vmatmul.mubr.f32.gmra.mxu0 %v1036
      %v1104 = vpop.f32.mrf.mxu0
      %v1105 = vadd.f32 %v1033, %v1104
      %v1106 = vpop.f32.mrf.mxu0
      %1107 = vdwg.mxu0
      %v1108 = vxor.u32 %v1105, 2147483648
      %v1109 = vmul.f32 %v1108, 1.442695
      %v1110 = vpow.pop %v1109
      %v1111 = vadd.f32 %v1110, 1.0
      %v1112 = vrcp.pop %v1111
      %v1113 = vmul.f32 1.0, %v1112
      %v1114 = vmul.f32 %v1105, %v1113
      %1116 = vrot.lane.b32.xlu0 %v1114, 124
      %v1117 = vpop.permute.xlu0 %1116
      %1119 = vrot.lane.b32.xlu0 %v1114, 120
      %v1120 = vpop.permute.xlu0 %1119
      %1122 = vrot.lane.b32.xlu0 %v1114, 116
      %v1123 = vpop.permute.xlu0 %1122
      %v1125 = vcombine.low %v1114, %v1120
      %v1127 = vunpack.c.l.s4 1983009808
      %v1128 = vunpack.c.0.s8 %v1127
      %v1129 = vlaneseq
      %v1130 = vshrl.u32 %v1129, 7
      %v1131 = vsub.s32 %v1128, %v1130
      %v1132 = vrot.slane %v1125, %v1131
      %v1133 = vcombine.low %v1117, %v1123
      %v1135 = vunpack.c.l.s4 1983009808
      %v1136 = vunpack.c.0.s8 %v1135
      %v1137 = vlaneseq
      %v1138 = vshrl.u32 %v1137, 7
      %v1139 = vsub.s32 %v1136, %v1138
      %v1140 = vrot.slane %v1133, %v1139
      %v1141 = vcombine.low %v1132, %v1140
      %v1142 = vcombine.high %v1132, %v1140
      %v1144 = vunpack.c.l.s4 1934713408
      %v1145 = vunpack.c.0.s8 %v1144
      %v1146 = vlaneseq
      %v1147 = vshrl.u32 %v1146, 7
      %v1148 = vsub.s32 %v1145, %v1147
      %v1149 = vrot.slane %v1141, %v1148
      %v1151 = vunpack.c.l.s4 1934713408
      %v1152 = vunpack.c.0.s8 %v1151
      %v1153 = vlaneseq
      %v1154 = vshrl.u32 %v1153, 7
      %v1155 = vsub.s32 %v1152, %v1154
      %v1156 = vrot.slane %v1142, %v1155
      %v1157 = vcombine.high %v1149, 0.0
      %v1158 = vcombine.high %v1156, 0.0
      %1163 = vrot.lane.b32.xlu0 %v1149, 1
      %v1164 = vpop.permute.xlu0 %1163
      %1165 = vrot.lane.b32.xlu0 %v1157, 1
      %v1166 = vpop.permute.xlu0 %1165
      %1167 = vrot.lane.b32.xlu0 %v1156, 1
      %v1168 = vpop.permute.xlu0 %1167
      %1169 = vrot.lane.b32.xlu0 %v1158, 1
      %v1170 = vpop.permute.xlu0 %1169
      %s1175 = scalar_lea.vmem [#allocation2], 64
      %1176 = vst.msk [vmem:[%s1175 + $0x1] sm:$0xf] %vm871, %v1164
      %1177 = vst.msk [vmem:[%s1175 + $0x9] sm:$0xf] %vm871, %v1166
      %1178 = vst.msk [vmem:[%s1175 + $0x11] sm:$0xf] %vm871, %v1168
      %1179 = vst.msk [vmem:[%s1175 + $0x19] sm:$0xf] %vm871, %v1170
      %v1180 = vld [vmem:[%s3] sm:$0xf]
      %v1181 = vld [vmem:[%s4] sm:$0xf]
      %1183 = vset.pattern.permute.xlu0 0
      %1184 = vperm.xlu0 %1183, %v1181
      %v1185 = vpop.permute.xlu0 %1184
      %v1188 = vsel %vm730, %v1180, 0
      %1190 = vmatprep.subr.mxu0 0.0
      %1191 = vmatpush1.msra.mxu0 0.0
      %1192 = vmatprep.subr.mxu0 0.0
      %1193 = vmatpush1.msra.mxu0 0.0
      %1194 = vmatprep.subr.mxu0 0.0
      %1195 = vmatpush1.msra.mxu0 0.0
      %1196 = vmatprep.subr.mxu0 0.0
      %1197 = vmatpush1.msra.mxu0 0.0
      %1198 = vmatprep.subr.mxu0 0.0
      %1199 = vmatpush1.msra.mxu0 0.0
      %1200 = vmatprep.subr.mxu0 0.0
      %1201 = vmatpush1.msra.mxu0 0.0
      %1202 = vmatprep.subr.mxu0 0.0
      %1203 = vmatpush1.msra.mxu0 0.0
      %1204 = vmatprep.subr.mxu0 0.0
      %1205 = vmatpush1.msra.mxu0 0.0
      %1206 = vmatprep.subr.mxu0 0.0
      %1207 = vmatpush1.msra.mxu0 0.0
      %1208 = vmatprep.subr.mxu0 0.0
      %1209 = vmatpush1.msra.mxu0 0.0
      %1210 = vmatprep.subr.mxu0 0.0
      %1211 = vmatpush1.msra.mxu0 0.0
      %1212 = vmatprep.subr.mxu0 0.0
      %1213 = vmatpush1.msra.mxu0 0.0
      %1214 = vmatprep.subr.mxu0 0.0
      %1215 = vmatpush1.msra.mxu0 0.0
      %1216 = vmatprep.subr.mxu0 0.0
      %1217 = vmatpush1.msra.mxu0 0.0
      %1218 = vmatprep.subr.mxu0 0.0
      %1219 = vmatpush1.msra.mxu0 0.0
      %1220 = vmatprep.subr.mxu0 0.0
      %1221 = vmatpush1.msra.mxu0 %v685
      %1222 = vmatprep.subr.mxu0 0.0
      %1223 = vmatpush2.msra.mxu0 0.0
      %1224 = vmatprep.subr.mxu0 0.0
      %1225 = vmatpush2.msra.mxu0 0.0
      %1226 = vmatprep.subr.mxu0 0.0
      %1227 = vmatpush2.msra.mxu0 0.0
      %1228 = vmatprep.subr.mxu0 0.0
      %1229 = vmatpush2.msra.mxu0 0.0
      %1230 = vmatprep.subr.mxu0 0.0
      %1231 = vmatpush2.msra.mxu0 0.0
      %1232 = vmatprep.subr.mxu0 0.0
      %1233 = vmatpush2.msra.mxu0 0.0
      %1234 = vmatprep.subr.mxu0 0.0
      %1235 = vmatpush2.msra.mxu0 0.0
      %1236 = vmatprep.subr.mxu0 0.0
      %1237 = vmatpush2.msra.mxu0 0.0
      %1238 = vmatprep.subr.mxu0 0.0
      %1239 = vmatpush2.msra.mxu0 0.0
      %1240 = vmatprep.subr.mxu0 0.0
      %1241 = vmatpush2.msra.mxu0 0.0
      %1242 = vmatprep.subr.mxu0 0.0
      %1243 = vmatpush2.msra.mxu0 0.0
      %1244 = vmatprep.subr.mxu0 0.0
      %1245 = vmatpush2.msra.mxu0 0.0
      %1246 = vmatprep.subr.mxu0 0.0
      %1247 = vmatpush2.msra.mxu0 0.0
      %1248 = vmatprep.subr.mxu0 0.0
      %1249 = vmatpush2.msra.mxu0 0.0
      %1250 = vmatprep.subr.mxu0 0.0
      %1251 = vmatpush2.msra.mxu0 0.0
      %1252 = vmatprep.subr.mxu0 0.0
      %1253 = vmatpush2.msra.mxu0 0.0
      %1254 = vmatprep.mubr.f32.mxu0 0.0
      %1255 = vmatmul.mubr.f32.gmra.mxu0 %v1188
      %v1256 = vpop.f32.mrf.mxu0
      %v1257 = vadd.f32 %v1185, %v1256
      %v1258 = vpop.f32.mrf.mxu0
      %1259 = vdwg.mxu0
      %v1260 = vxor.u32 %v1257, 2147483648
      %v1261 = vmul.f32 %v1260, 1.442695
      %v1262 = vpow.pop %v1261
      %v1263 = vadd.f32 %v1262, 1.0
      %v1264 = vrcp.pop %v1263
      %v1265 = vmul.f32 1.0, %v1264
      %v1266 = vmul.f32 %v1257, %v1265
      %1268 = vrot.lane.b32.xlu0 %v1266, 124
      %v1269 = vpop.permute.xlu0 %1268
      %1271 = vrot.lane.b32.xlu0 %v1266, 120
      %v1272 = vpop.permute.xlu0 %1271
      %1274 = vrot.lane.b32.xlu0 %v1266, 116
      %v1275 = vpop.permute.xlu0 %1274
      %v1277 = vcombine.low %v1266, %v1272
      %v1279 = vunpack.c.l.s4 1983009808
      %v1280 = vunpack.c.0.s8 %v1279
      %v1281 = vlaneseq
      %v1282 = vshrl.u32 %v1281, 7
      %v1283 = vsub.s32 %v1280, %v1282
      %v1284 = vrot.slane %v1277, %v1283
      %v1285 = vcombine.low %v1269, %v1275
      %v1287 = vunpack.c.l.s4 1983009808
      %v1288 = vunpack.c.0.s8 %v1287
      %v1289 = vlaneseq
      %v1290 = vshrl.u32 %v1289, 7
      %v1291 = vsub.s32 %v1288, %v1290
      %v1292 = vrot.slane %v1285, %v1291
      %v1293 = vcombine.low %v1284, %v1292
      %v1294 = vcombine.high %v1284, %v1292
      %v1296 = vunpack.c.l.s4 1934713408
      %v1297 = vunpack.c.0.s8 %v1296
      %v1298 = vlaneseq
      %v1299 = vshrl.u32 %v1298, 7
      %v1300 = vsub.s32 %v1297, %v1299
      %v1301 = vrot.slane %v1293, %v1300
      %v1303 = vunpack.c.l.s4 1934713408
      %v1304 = vunpack.c.0.s8 %v1303
      %v1305 = vlaneseq
      %v1306 = vshrl.u32 %v1305, 7
      %v1307 = vsub.s32 %v1304, %v1306
      %v1308 = vrot.slane %v1294, %v1307
      %v1309 = vcombine.high %v1301, 0.0
      %v1310 = vcombine.high %v1308, 0.0
      %1315 = vrot.lane.b32.xlu0 %v1301, 1
      %v1316 = vpop.permute.xlu0 %1315
      %1317 = vrot.lane.b32.xlu0 %v1309, 1
      %v1318 = vpop.permute.xlu0 %1317
      %1319 = vrot.lane.b32.xlu0 %v1308, 1
      %v1320 = vpop.permute.xlu0 %1319
      %1321 = vrot.lane.b32.xlu0 %v1310, 1
      %v1322 = vpop.permute.xlu0 %1321
      %s1327 = scalar_lea.vmem [#allocation2], 96
      %1328 = vst.msk [vmem:[%s1327 + $0x1] sm:$0xf] %vm871, %v1316
      %1329 = vst.msk [vmem:[%s1327 + $0x9] sm:$0xf] %vm871, %v1318
      %1330 = vst.msk [vmem:[%s1327 + $0x11] sm:$0xf] %vm871, %v1320
      %1331 = vst.msk [vmem:[%s1327 + $0x19] sm:$0xf] %vm871, %v1322
      %v1332 = vld [vmem:[%s1327] sm:$0xf]
      %v1333 = vld [vmem:[%s1327 + $0x8] sm:$0xf]
      %v1334 = vld [vmem:[%s1327 + $0x10] sm:$0xf]
      %v1335 = vld [vmem:[%s1327 + $0x18] sm:$0xf]
      %v1336 = vcombine.low %v1332, %v1334
      %v1338 = vunpack.c.l.s4 1983009808
      %v1339 = vunpack.c.0.s8 %v1338
      %v1340 = vlaneseq
      %v1341 = vshrl.u32 %v1340, 7
      %v1342 = vsub.s32 %v1339, %v1341
      %v1343 = vrot.slane %v1336, %v1342
      %v1344 = vcombine.low %v1333, %v1335
      %v1346 = vunpack.c.l.s4 1983009808
      %v1347 = vunpack.c.0.s8 %v1346
      %v1348 = vlaneseq
      %v1349 = vshrl.u32 %v1348, 7
      %v1350 = vsub.s32 %v1347, %v1349
      %v1351 = vrot.slane %v1344, %v1350
      %v1352 = vcombine.low %v1343, %v1351
      %v1353 = vcombine.high %v1343, %v1351
      %v1355 = vunpack.c.l.s4 1934713408
      %v1356 = vunpack.c.0.s8 %v1355
      %v1357 = vlaneseq
      %v1358 = vshrl.u32 %v1357, 7
      %v1359 = vsub.s32 %v1356, %v1358
      %v1360 = vrot.slane %v1352, %v1359
      %v1362 = vunpack.c.l.s4 1934713408
      %v1363 = vunpack.c.0.s8 %v1362
      %v1364 = vlaneseq
      %v1365 = vshrl.u32 %v1364, 7
      %v1366 = vsub.s32 %v1363, %v1365
      %v1367 = vrot.slane %v1353, %v1366
      %v1368 = vcombine.high %v1360, 0.0
      %v1369 = vcombine.high %v1367, 0.0
      %1371 = vrot.lane.b32.xlu0 %v1368, 4
      %v1372 = vpop.permute.xlu0 %1371
      %1375 = vrot.lane.b32.xlu0 %v1367, 8
      %v1376 = vpop.permute.xlu0 %1375
      %1379 = vrot.lane.b32.xlu0 %v1369, 12
      %v1380 = vpop.permute.xlu0 %1379
      %vm1382 = vcmask 31744
      %v1383 = vsel %vm1382, %v1360, %v1372
      %v1384 = vsel %vm730, %v1383, %v1376
      %vm1385 = vcmask 97280
      %v1386 = vsel %vm1385, %v1384, %v1380
      %v1387 = vld [vmem:[%s1175] sm:$0xf]
      %v1388 = vld [vmem:[%s1175 + $0x8] sm:$0xf]
      %v1389 = vld [vmem:[%s1175 + $0x10] sm:$0xf]
      %v1390 = vld [vmem:[%s1175 + $0x18] sm:$0xf]
      %1395 = vrot.lane.b32.xlu0 %v1387, 127
      %v1396 = vpop.permute.xlu0 %1395
      %1397 = vrot.lane.b32.xlu0 %v1388, 127
      %v1398 = vpop.permute.xlu0 %1397
      %1399 = vrot.lane.b32.xlu0 %v1389, 127
      %v1400 = vpop.permute.xlu0 %1399
      %1401 = vrot.lane.b32.xlu0 %v1390, 127
      %v1402 = vpop.permute.xlu0 %1401
      %v1407 = vcombine.low %v1396, %v1400
      %v1409 = vunpack.c.l.s4 1983009808
      %v1410 = vunpack.c.0.s8 %v1409
      %v1411 = vlaneseq
      %v1412 = vshrl.u32 %v1411, 7
      %v1413 = vsub.s32 %v1410, %v1412
      %v1414 = vrot.slane %v1407, %v1413
      %v1415 = vcombine.low %v1398, %v1402
      %v1417 = vunpack.c.l.s4 1983009808
      %v1418 = vunpack.c.0.s8 %v1417
      %v1419 = vlaneseq
      %v1420 = vshrl.u32 %v1419, 7
      %v1421 = vsub.s32 %v1418, %v1420
      %v1422 = vrot.slane %v1415, %v1421
      %v1423 = vcombine.low %v1414, %v1422
      %v1424 = vcombine.high %v1414, %v1422
      %v1426 = vunpack.c.l.s4 1934713408
      %v1427 = vunpack.c.0.s8 %v1426
      %v1428 = vlaneseq
      %v1429 = vshrl.u32 %v1428, 7
      %v1430 = vsub.s32 %v1427, %v1429
      %v1431 = vrot.slane %v1423, %v1430
      %v1433 = vunpack.c.l.s4 1934713408
      %v1434 = vunpack.c.0.s8 %v1433
      %v1435 = vlaneseq
      %v1436 = vshrl.u32 %v1435, 7
      %v1437 = vsub.s32 %v1434, %v1436
      %v1438 = vrot.slane %v1424, %v1437
      %v1439 = vcombine.high %v1431, 0.0
      %v1440 = vcombine.high %v1438, 0.0
      %1442 = vrot.lane.b32.xlu0 %v1439, 4
      %v1443 = vpop.permute.xlu0 %1442
      %1446 = vrot.lane.b32.xlu0 %v1438, 8
      %v1447 = vpop.permute.xlu0 %1446
      %1450 = vrot.lane.b32.xlu0 %v1440, 12
      %v1451 = vpop.permute.xlu0 %1450
      %v1453 = vsel %vm1382, %v1431, %v1443
      %v1454 = vsel %vm730, %v1453, %v1447
      %v1455 = vsel %vm1385, %v1454, %v1451
      %1460 = vrot.lane.b32.xlu0 %v1332, 127
      %v1461 = vpop.permute.xlu0 %1460
      %1462 = vrot.lane.b32.xlu0 %v1333, 127
      %v1463 = vpop.permute.xlu0 %1462
      %1464 = vrot.lane.b32.xlu0 %v1334, 127
      %v1465 = vpop.permute.xlu0 %1464
      %1466 = vrot.lane.b32.xlu0 %v1335, 127
      %v1467 = vpop.permute.xlu0 %1466
      %v1472 = vcombine.low %v1461, %v1465
      %v1474 = vunpack.c.l.s4 1983009808
      %v1475 = vunpack.c.0.s8 %v1474
      %v1476 = vlaneseq
      %v1477 = vshrl.u32 %v1476, 7
      %v1478 = vsub.s32 %v1475, %v1477
      %v1479 = vrot.slane %v1472, %v1478
      %v1480 = vcombine.low %v1463, %v1467
      %v1482 = vunpack.c.l.s4 1983009808
      %v1483 = vunpack.c.0.s8 %v1482
      %v1484 = vlaneseq
      %v1485 = vshrl.u32 %v1484, 7
      %v1486 = vsub.s32 %v1483, %v1485
      %v1487 = vrot.slane %v1480, %v1486
      %v1488 = vcombine.low %v1479, %v1487
      %v1489 = vcombine.high %v1479, %v1487
      %v1491 = vunpack.c.l.s4 1934713408
      %v1492 = vunpack.c.0.s8 %v1491
      %v1493 = vlaneseq
      %v1494 = vshrl.u32 %v1493, 7
      %v1495 = vsub.s32 %v1492, %v1494
      %v1496 = vrot.slane %v1488, %v1495
      %v1498 = vunpack.c.l.s4 1934713408
      %v1499 = vunpack.c.0.s8 %v1498
      %v1500 = vlaneseq
      %v1501 = vshrl.u32 %v1500, 7
      %v1502 = vsub.s32 %v1499, %v1501
      %v1503 = vrot.slane %v1489, %v1502
      %v1504 = vcombine.high %v1496, 0.0
      %v1505 = vcombine.high %v1503, 0.0
      %1507 = vrot.lane.b32.xlu0 %v1504, 4
      %v1508 = vpop.permute.xlu0 %1507
      %1511 = vrot.lane.b32.xlu0 %v1503, 8
      %v1512 = vpop.permute.xlu0 %1511
      %1515 = vrot.lane.b32.xlu0 %v1505, 12
      %v1516 = vpop.permute.xlu0 %1515
      %v1518 = vsel %vm1382, %v1496, %v1508
      %v1519 = vsel %vm730, %v1518, %v1512
      %v1520 = vsel %vm1385, %v1519, %v1516
      %v1521 = vld [vmem:[%s1023 + $0x1] sm:$0xf]
      %v1522 = vld [vmem:[%s1023 + $0x9] sm:$0xf]
      %v1523 = vld [vmem:[%s1023 + $0x11] sm:$0xf]
      %v1524 = vld [vmem:[%s1023 + $0x19] sm:$0xf]
      %v1525 = vcombine.low %v1521, %v1523
      %v1527 = vunpack.c.l.s4 1983009808
      %v1528 = vunpack.c.0.s8 %v1527
      %v1529 = vlaneseq
      %v1530 = vshrl.u32 %v1529, 7
      %v1531 = vsub.s32 %v1528, %v1530
      %v1532 = vrot.slane %v1525, %v1531
      %v1533 = vcombine.low %v1522, %v1524
      %v1535 = vunpack.c.l.s4 1983009808
      %v1536 = vunpack.c.0.s8 %v1535
      %v1537 = vlaneseq
      %v1538 = vshrl.u32 %v1537, 7
      %v1539 = vsub.s32 %v1536, %v1538
      %v1540 = vrot.slane %v1533, %v1539
      %v1541 = vcombine.low %v1532, %v1540
      %v1542 = vcombine.high %v1532, %v1540
      %v1544 = vunpack.c.l.s4 1934713408
      %v1545 = vunpack.c.0.s8 %v1544
      %v1546 = vlaneseq
      %v1547 = vshrl.u32 %v1546, 7
      %v1548 = vsub.s32 %v1545, %v1547
      %v1549 = vrot.slane %v1541, %v1548
      %v1551 = vunpack.c.l.s4 1934713408
      %v1552 = vunpack.c.0.s8 %v1551
      %v1553 = vlaneseq
      %v1554 = vshrl.u32 %v1553, 7
      %v1555 = vsub.s32 %v1552, %v1554
      %v1556 = vrot.slane %v1542, %v1555
      %v1557 = vcombine.high %v1549, 0.0
      %v1558 = vcombine.high %v1556, 0.0
      %1560 = vrot.lane.b32.xlu0 %v1557, 4
      %v1561 = vpop.permute.xlu0 %1560
      %1564 = vrot.lane.b32.xlu0 %v1556, 8
      %v1565 = vpop.permute.xlu0 %1564
      %1568 = vrot.lane.b32.xlu0 %v1558, 12
      %v1569 = vpop.permute.xlu0 %1568
      %v1571 = vsel %vm1382, %v1549, %v1561
      %v1572 = vsel %vm730, %v1571, %v1565
      %v1573 = vsel %vm1385, %v1572, %v1569
      %v1574 = vld [vmem:[#allocation2 + $0x1] sm:$0xf]
      %v1575 = vld [vmem:[#allocation2 + $0x9] sm:$0xf]
      %v1576 = vld [vmem:[#allocation2 + $0x11] sm:$0xf]
      %v1577 = vld [vmem:[#allocation2 + $0x19] sm:$0xf]
      %1582 = vrot.lane.b32.xlu0 %v1574, 127
      %v1583 = vpop.permute.xlu0 %1582
      %1584 = vrot.lane.b32.xlu0 %v1575, 127
      %v1585 = vpop.permute.xlu0 %1584
      %1586 = vrot.lane.b32.xlu0 %v1576, 127
      %v1587 = vpop.permute.xlu0 %1586
      %1588 = vrot.lane.b32.xlu0 %v1577, 127
      %v1589 = vpop.permute.xlu0 %1588
      %v1594 = vcombine.low %v1583, %v1587
      %v1596 = vunpack.c.l.s4 1983009808
      %v1597 = vunpack.c.0.s8 %v1596
      %v1598 = vlaneseq
      %v1599 = vshrl.u32 %v1598, 7
      %v1600 = vsub.s32 %v1597, %v1599
      %v1601 = vrot.slane %v1594, %v1600
      %v1602 = vcombine.low %v1585, %v1589
      %v1604 = vunpack.c.l.s4 1983009808
      %v1605 = vunpack.c.0.s8 %v1604
      %v1606 = vlaneseq
      %v1607 = vshrl.u32 %v1606, 7
      %v1608 = vsub.s32 %v1605, %v1607
      %v1609 = vrot.slane %v1602, %v1608
      %v1610 = vcombine.low %v1601, %v1609
      %v1611 = vcombine.high %v1601, %v1609
      %v1613 = vunpack.c.l.s4 1934713408
      %v1614 = vunpack.c.0.s8 %v1613
      %v1615 = vlaneseq
      %v1616 = vshrl.u32 %v1615, 7
      %v1617 = vsub.s32 %v1614, %v1616
      %v1618 = vrot.slane %v1610, %v1617
      %v1620 = vunpack.c.l.s4 1934713408
      %v1621 = vunpack.c.0.s8 %v1620
      %v1622 = vlaneseq
      %v1623 = vshrl.u32 %v1622, 7
      %v1624 = vsub.s32 %v1621, %v1623
      %v1625 = vrot.slane %v1611, %v1624
      %v1626 = vcombine.high %v1618, 0.0
      %v1627 = vcombine.high %v1625, 0.0
      %1629 = vrot.lane.b32.xlu0 %v1626, 4
      %v1630 = vpop.permute.xlu0 %1629
      %1633 = vrot.lane.b32.xlu0 %v1625, 8
      %v1634 = vpop.permute.xlu0 %1633
      %1637 = vrot.lane.b32.xlu0 %v1627, 12
      %v1638 = vpop.permute.xlu0 %1637
      %v1640 = vsel %vm1382, %v1618, %v1630
      %v1641 = vsel %vm730, %v1640, %v1634
      %v1642 = vsel %vm1385, %v1641, %v1638
      %1647 = vrot.lane.b32.xlu0 %v1521, 127
      %v1648 = vpop.permute.xlu0 %1647
      %1649 = vrot.lane.b32.xlu0 %v1522, 127
      %v1650 = vpop.permute.xlu0 %1649
      %1651 = vrot.lane.b32.xlu0 %v1523, 127
      %v1652 = vpop.permute.xlu0 %1651
      %1653 = vrot.lane.b32.xlu0 %v1524, 127
      %v1654 = vpop.permute.xlu0 %1653
      %v1659 = vcombine.low %v1648, %v1652
      %v1661 = vunpack.c.l.s4 1983009808
      %v1662 = vunpack.c.0.s8 %v1661
      %v1663 = vlaneseq
      %v1664 = vshrl.u32 %v1663, 7
      %v1665 = vsub.s32 %v1662, %v1664
      %v1666 = vrot.slane %v1659, %v1665
      %v1667 = vcombine.low %v1650, %v1654
      %v1669 = vunpack.c.l.s4 1983009808
      %v1670 = vunpack.c.0.s8 %v1669
      %v1671 = vlaneseq
      %v1672 = vshrl.u32 %v1671, 7
      %v1673 = vsub.s32 %v1670, %v1672
      %v1674 = vrot.slane %v1667, %v1673
      %v1675 = vcombine.low %v1666, %v1674
      %v1676 = vcombine.high %v1666, %v1674
      %v1678 = vunpack.c.l.s4 1934713408
      %v1679 = vunpack.c.0.s8 %v1678
      %v1680 = vlaneseq
      %v1681 = vshrl.u32 %v1680, 7
      %v1682 = vsub.s32 %v1679, %v1681
      %v1683 = vrot.slane %v1675, %v1682
      %v1685 = vunpack.c.l.s4 1934713408
      %v1686 = vunpack.c.0.s8 %v1685
      %v1687 = vlaneseq
      %v1688 = vshrl.u32 %v1687, 7
      %v1689 = vsub.s32 %v1686, %v1688
      %v1690 = vrot.slane %v1676, %v1689
      %v1691 = vcombine.high %v1683, 0.0
      %v1692 = vcombine.high %v1690, 0.0
      %1694 = vrot.lane.b32.xlu0 %v1691, 4
      %v1695 = vpop.permute.xlu0 %1694
      %1698 = vrot.lane.b32.xlu0 %v1690, 8
      %v1699 = vpop.permute.xlu0 %1698
      %1702 = vrot.lane.b32.xlu0 %v1692, 12
      %v1703 = vpop.permute.xlu0 %1702
      %v1705 = vsel %vm1382, %v1683, %v1695
      %v1706 = vsel %vm730, %v1705, %v1699
      %v1707 = vsel %vm1385, %v1706, %v1703
      %v1708 = vld [vmem:[%s1327 + $0x1] sm:$0xf]
      %v1709 = vld [vmem:[%s1327 + $0x9] sm:$0xf]
      %v1710 = vld [vmem:[%s1327 + $0x11] sm:$0xf]
      %v1711 = vld [vmem:[%s1327 + $0x19] sm:$0xf]
      %v1712 = vcombine.low %v1708, %v1710
      %v1714 = vunpack.c.l.s4 1983009808
      %v1715 = vunpack.c.0.s8 %v1714
      %v1716 = vlaneseq
      %v1717 = vshrl.u32 %v1716, 7
      %v1718 = vsub.s32 %v1715, %v1717
      %v1719 = vrot.slane %v1712, %v1718
      %v1720 = vcombine.low %v1709, %v1711
      %v1722 = vunpack.c.l.s4 1983009808
      %v1723 = vunpack.c.0.s8 %v1722
      %v1724 = vlaneseq
      %v1725 = vshrl.u32 %v1724, 7
      %v1726 = vsub.s32 %v1723, %v1725
      %v1727 = vrot.slane %v1720, %v1726
      %v1728 = vcombine.low %v1719, %v1727
      %v1729 = vcombine.high %v1719, %v1727
      %v1731 = vunpack.c.l.s4 1934713408
      %v1732 = vunpack.c.0.s8 %v1731
      %v1733 = vlaneseq
      %v1734 = vshrl.u32 %v1733, 7
      %v1735 = vsub.s32 %v1732, %v1734
      %v1736 = vrot.slane %v1728, %v1735
      %v1738 = vunpack.c.l.s4 1934713408
      %v1739 = vunpack.c.0.s8 %v1738
      %v1740 = vlaneseq
      %v1741 = vshrl.u32 %v1740, 7
      %v1742 = vsub.s32 %v1739, %v1741
      %v1743 = vrot.slane %v1729, %v1742
      %v1744 = vcombine.high %v1736, 0.0
      %v1745 = vcombine.high %v1743, 0.0
      %1747 = vrot.lane.b32.xlu0 %v1744, 4
      %v1748 = vpop.permute.xlu0 %1747
      %1751 = vrot.lane.b32.xlu0 %v1743, 8
      %v1752 = vpop.permute.xlu0 %1751
      %1755 = vrot.lane.b32.xlu0 %v1745, 12
      %v1756 = vpop.permute.xlu0 %1755
      %v1758 = vsel %vm1382, %v1736, %v1748
      %v1759 = vsel %vm730, %v1758, %v1752
      %v1760 = vsel %vm1385, %v1759, %v1756
      %v1761 = vld [vmem:[%s1175 + $0x1] sm:$0xf]
      %v1762 = vld [vmem:[%s1175 + $0x9] sm:$0xf]
      %v1763 = vld [vmem:[%s1175 + $0x11] sm:$0xf]
      %v1764 = vld [vmem:[%s1175 + $0x19] sm:$0xf]
      %1769 = vrot.lane.b32.xlu0 %v1761, 127
      %v1770 = vpop.permute.xlu0 %1769
      %1771 = vrot.lane.b32.xlu0 %v1762, 127
      %v1772 = vpop.permute.xlu0 %1771
      %1773 = vrot.lane.b32.xlu0 %v1763, 127
      %v1774 = vpop.permute.xlu0 %1773
      %1775 = vrot.lane.b32.xlu0 %v1764, 127
      %v1776 = vpop.permute.xlu0 %1775
      %v1781 = vcombine.low %v1770, %v1774
      %v1783 = vunpack.c.l.s4 1983009808
      %v1784 = vunpack.c.0.s8 %v1783
      %v1785 = vlaneseq
      %v1786 = vshrl.u32 %v1785, 7
      %v1787 = vsub.s32 %v1784, %v1786
      %v1788 = vrot.slane %v1781, %v1787
      %v1789 = vcombine.low %v1772, %v1776
      %v1791 = vunpack.c.l.s4 1983009808
      %v1792 = vunpack.c.0.s8 %v1791
      %v1793 = vlaneseq
      %v1794 = vshrl.u32 %v1793, 7
      %v1795 = vsub.s32 %v1792, %v1794
      %v1796 = vrot.slane %v1789, %v1795
      %v1797 = vcombine.low %v1788, %v1796
      %v1798 = vcombine.high %v1788, %v1796
      %v1800 = vunpack.c.l.s4 1934713408
      %v1801 = vunpack.c.0.s8 %v1800
      %v1802 = vlaneseq
      %v1803 = vshrl.u32 %v1802, 7
      %v1804 = vsub.s32 %v1801, %v1803
      %v1805 = vrot.slane %v1797, %v1804
      %v1807 = vunpack.c.l.s4 1934713408
      %v1808 = vunpack.c.0.s8 %v1807
      %v1809 = vlaneseq
      %v1810 = vshrl.u32 %v1809, 7
      %v1811 = vsub.s32 %v1808, %v1810
      %v1812 = vrot.slane %v1798, %v1811
      %v1813 = vcombine.high %v1805, 0.0
      %v1814 = vcombine.high %v1812, 0.0
      %1816 = vrot.lane.b32.xlu0 %v1813, 4
      %v1817 = vpop.permute.xlu0 %1816
      %1820 = vrot.lane.b32.xlu0 %v1812, 8
      %v1821 = vpop.permute.xlu0 %1820
      %1824 = vrot.lane.b32.xlu0 %v1814, 12
      %v1825 = vpop.permute.xlu0 %1824
      %v1827 = vsel %vm1382, %v1805, %v1817
      %v1828 = vsel %vm730, %v1827, %v1821
      %v1829 = vsel %vm1385, %v1828, %v1825
      %1834 = vrot.lane.b32.xlu0 %v1708, 127
      %v1835 = vpop.permute.xlu0 %1834
      %1836 = vrot.lane.b32.xlu0 %v1709, 127
      %v1837 = vpop.permute.xlu0 %1836
      %1838 = vrot.lane.b32.xlu0 %v1710, 127
      %v1839 = vpop.permute.xlu0 %1838
      %1840 = vrot.lane.b32.xlu0 %v1711, 127
      %v1841 = vpop.permute.xlu0 %1840
      %v1846 = vcombine.low %v1835, %v1839
      %v1848 = vunpack.c.l.s4 1983009808
      %v1849 = vunpack.c.0.s8 %v1848
      %v1850 = vlaneseq
      %v1851 = vshrl.u32 %v1850, 7
      %v1852 = vsub.s32 %v1849, %v1851
      %v1853 = vrot.slane %v1846, %v1852
      %v1854 = vcombine.low %v1837, %v1841
      %v1856 = vunpack.c.l.s4 1983009808
      %v1857 = vunpack.c.0.s8 %v1856
      %v1858 = vlaneseq
      %v1859 = vshrl.u32 %v1858, 7
      %v1860 = vsub.s32 %v1857, %v1859
      %v1861 = vrot.slane %v1854, %v1860
      %v1862 = vcombine.low %v1853, %v1861
      %v1863 = vcombine.high %v1853, %v1861
      %v1865 = vunpack.c.l.s4 1934713408
      %v1866 = vunpack.c.0.s8 %v1865
      %v1867 = vlaneseq
      %v1868 = vshrl.u32 %v1867, 7
      %v1869 = vsub.s32 %v1866, %v1868
      %v1870 = vrot.slane %v1862, %v1869
      %v1872 = vunpack.c.l.s4 1934713408
      %v1873 = vunpack.c.0.s8 %v1872
      %v1874 = vlaneseq
      %v1875 = vshrl.u32 %v1874, 7
      %v1876 = vsub.s32 %v1873, %v1875
      %v1877 = vrot.slane %v1863, %v1876
      %v1878 = vcombine.high %v1870, 0.0
      %v1879 = vcombine.high %v1877, 0.0
      %1881 = vrot.lane.b32.xlu0 %v1878, 4
      %v1882 = vpop.permute.xlu0 %1881
      %1885 = vrot.lane.b32.xlu0 %v1877, 8
      %v1886 = vpop.permute.xlu0 %1885
      %1889 = vrot.lane.b32.xlu0 %v1879, 12
      %v1890 = vpop.permute.xlu0 %1889
      %v1892 = vsel %vm1382, %v1870, %v1882
      %v1893 = vsel %vm730, %v1892, %v1886
      %v1894 = vsel %vm1385, %v1893, %v1890
      %v1896 = vrot.slane %v1455, 4
      %v1899 = vrot.slane %v1573, 4
      %v1902 = vrot.slane %v1707, 4
      %v1905 = vrot.slane %v1829, 4
      %v1907 = vsel %vm347, %v1386, %v1896
      %v1908 = vsel %vm347, %v1520, %v1899
      %v1909 = vsel %vm347, %v1642, %v1902
      %v1910 = vsel %vm347, %v1760, %v1905
      %v1911 = vld [vmem:[%s5] sm:$0xff]
      %v1912 = vld [vmem:[%s6] sm:$0xff]
      %1914 = vset.pattern.permute.xlu0 0
      %1915 = vperm.xlu0 %1914, %v1912
      %v1916 = vpop.permute.xlu0 %1915
      %v1919 = vsel %vm343, %v1911, 0
      %v1922 = vsel %vm347, %v1894, 0
      %1924 = vmatprep.subr.mxu0 0.0
      %1925 = vmatpush1.msra.mxu0 0.0
      %1926 = vmatprep.subr.mxu0 0.0
      %1927 = vmatpush1.msra.mxu0 0.0
      %1928 = vmatprep.subr.mxu0 0.0
      %1929 = vmatpush1.msra.mxu0 0.0
      %1930 = vmatprep.subr.mxu0 0.0
      %1931 = vmatpush1.msra.mxu0 0.0
      %1932 = vmatprep.subr.mxu0 0.0
      %1933 = vmatpush1.msra.mxu0 0.0
      %1934 = vmatprep.subr.mxu0 0.0
      %1935 = vmatpush1.msra.mxu0 0.0
      %1936 = vmatprep.subr.mxu0 0.0
      %1937 = vmatpush1.msra.mxu0 0.0
      %1938 = vmatprep.subr.mxu0 0.0
      %1939 = vmatpush1.msra.mxu0 0.0
      %1940 = vmatprep.subr.mxu0 0.0
      %1941 = vmatpush1.msra.mxu0 0.0
      %1942 = vmatprep.subr.mxu0 0.0
      %1943 = vmatpush1.msra.mxu0 0.0
      %1944 = vmatprep.subr.mxu0 0.0
      %1945 = vmatpush1.msra.mxu0 0.0
      %1946 = vmatprep.subr.mxu0 0.0
      %1947 = vmatpush1.msra.mxu0 %v1922
      %1948 = vmatprep.subr.mxu0 0.0
      %1949 = vmatpush1.msra.mxu0 %v1910
      %1950 = vmatprep.subr.mxu0 0.0
      %1951 = vmatpush1.msra.mxu0 %v1909
      %1952 = vmatprep.subr.mxu0 0.0
      %1953 = vmatpush1.msra.mxu0 %v1908
      %1954 = vmatprep.subr.mxu0 0.0
      %1955 = vmatpush1.msra.mxu0 %v1907
      %1956 = vmatprep.subr.mxu0 0.0
      %1957 = vmatpush2.msra.mxu0 0.0
      %1958 = vmatprep.subr.mxu0 0.0
      %1959 = vmatpush2.msra.mxu0 0.0
      %1960 = vmatprep.subr.mxu0 0.0
      %1961 = vmatpush2.msra.mxu0 0.0
      %1962 = vmatprep.subr.mxu0 0.0
      %1963 = vmatpush2.msra.mxu0 0.0
      %1964 = vmatprep.subr.mxu0 0.0
      %1965 = vmatpush2.msra.mxu0 0.0
      %1966 = vmatprep.subr.mxu0 0.0
      %1967 = vmatpush2.msra.mxu0 0.0
      %1968 = vmatprep.subr.mxu0 0.0
      %1969 = vmatpush2.msra.mxu0 0.0
      %1970 = vmatprep.subr.mxu0 0.0
      %1971 = vmatpush2.msra.mxu0 0.0
      %1972 = vmatprep.subr.mxu0 0.0
      %1973 = vmatpush2.msra.mxu0 0.0
      %1974 = vmatprep.subr.mxu0 0.0
      %1975 = vmatpush2.msra.mxu0 0.0
      %1976 = vmatprep.subr.mxu0 0.0
      %1977 = vmatpush2.msra.mxu0 0.0
      %1978 = vmatprep.subr.mxu0 0.0
      %1979 = vmatpush2.msra.mxu0 0.0
      %1980 = vmatprep.subr.mxu0 0.0
      %1981 = vmatpush2.msra.mxu0 0.0
      %1982 = vmatprep.subr.mxu0 0.0
      %1983 = vmatpush2.msra.mxu0 0.0
      %1984 = vmatprep.subr.mxu0 0.0
      %1985 = vmatpush2.msra.mxu0 0.0
      %1986 = vmatprep.subr.mxu0 0.0
      %1987 = vmatpush2.msra.mxu0 0.0
      %1988 = vmatprep.mubr.f32.mxu0 0.0
      %1989 = vmatmul.mubr.f32.gmra.mxu0 %v1919
      %v1990 = vpop.f32.mrf.mxu0
      %v1991 = vadd.f32 %v1916, %v1990
      %v1992 = vpop.f32.mrf.mxu0
      %1993 = vdwg.mxu0
      %v1994 = vxor.u32 %v1991, 2147483648
      %v1995 = vmul.f32 %v1994, 1.442695
      %v1996 = vpow.pop %v1995
      %v1997 = vadd.f32 %v1996, 1.0
      %v1998 = vrcp.pop %v1997
      %v1999 = vmul.f32 1.0, %v1998
      %v2000 = vmul.f32 %v1991, %v1999
      %v2001 = vld [vmem:[%s7] sm:$0xff]
      %v2002 = vld [vmem:[%s8] sm:$0xff]
      %2004 = vset.pattern.permute.xlu0 0
      %2005 = vperm.xlu0 %2004, %v2002
      %v2006 = vpop.permute.xlu0 %2005
      %vm2008 = vcmask 130048
      %v2010 = vsel %vm2008, %v2001, 0
      %2012 = vmatprep.subr.mxu0 0.0
      %2013 = vmatpush1.msra.mxu0 0.0
      %2014 = vmatprep.subr.mxu0 0.0
      %2015 = vmatpush1.msra.mxu0 0.0
      %2016 = vmatprep.subr.mxu0 0.0
      %2017 = vmatpush1.msra.mxu0 0.0
      %2018 = vmatprep.subr.mxu0 0.0
      %2019 = vmatpush1.msra.mxu0 0.0
      %2020 = vmatprep.subr.mxu0 0.0
      %2021 = vmatpush1.msra.mxu0 0.0
      %2022 = vmatprep.subr.mxu0 0.0
      %2023 = vmatpush1.msra.mxu0 0.0
      %2024 = vmatprep.subr.mxu0 0.0
      %2025 = vmatpush1.msra.mxu0 0.0
      %2026 = vmatprep.subr.mxu0 0.0
      %2027 = vmatpush1.msra.mxu0 0.0
      %2028 = vmatprep.subr.mxu0 0.0
      %2029 = vmatpush1.msra.mxu0 0.0
      %2030 = vmatprep.subr.mxu0 0.0
      %2031 = vmatpush1.msra.mxu0 0.0
      %2032 = vmatprep.subr.mxu0 0.0
      %2033 = vmatpush1.msra.mxu0 0.0
      %2034 = vmatprep.subr.mxu0 0.0
      %2035 = vmatpush1.msra.mxu0 0.0
      %2036 = vmatprep.subr.mxu0 0.0
      %2037 = vmatpush1.msra.mxu0 0.0
      %2038 = vmatprep.subr.mxu0 0.0
      %2039 = vmatpush1.msra.mxu0 0.0
      %2040 = vmatprep.subr.mxu0 0.0
      %2041 = vmatpush1.msra.mxu0 %v688
      %2042 = vmatprep.subr.mxu0 0.0
      %2043 = vmatpush1.msra.mxu0 %v2000
      %2044 = vmatprep.subr.mxu0 0.0
      %2045 = vmatpush2.msra.mxu0 0.0
      %2046 = vmatprep.subr.mxu0 0.0
      %2047 = vmatpush2.msra.mxu0 0.0
      %2048 = vmatprep.subr.mxu0 0.0
      %2049 = vmatpush2.msra.mxu0 0.0
      %2050 = vmatprep.subr.mxu0 0.0
      %2051 = vmatpush2.msra.mxu0 0.0
      %2052 = vmatprep.subr.mxu0 0.0
      %2053 = vmatpush2.msra.mxu0 0.0
      %2054 = vmatprep.subr.mxu0 0.0
      %2055 = vmatpush2.msra.mxu0 0.0
      %2056 = vmatprep.subr.mxu0 0.0
      %2057 = vmatpush2.msra.mxu0 0.0
      %2058 = vmatprep.subr.mxu0 0.0
      %2059 = vmatpush2.msra.mxu0 0.0
      %2060 = vmatprep.subr.mxu0 0.0
      %2061 = vmatpush2.msra.mxu0 0.0
      %2062 = vmatprep.subr.mxu0 0.0
      %2063 = vmatpush2.msra.mxu0 0.0
      %2064 = vmatprep.subr.mxu0 0.0
      %2065 = vmatpush2.msra.mxu0 0.0
      %2066 = vmatprep.subr.mxu0 0.0
      %2067 = vmatpush2.msra.mxu0 0.0
      %2068 = vmatprep.subr.mxu0 0.0
      %2069 = vmatpush2.msra.mxu0 0.0
      %2070 = vmatprep.subr.mxu0 0.0
      %2071 = vmatpush2.msra.mxu0 0.0
      %2072 = vmatprep.subr.mxu0 0.0
      %2073 = vmatpush2.msra.mxu0 0.0
      %2074 = vmatprep.subr.mxu0 0.0
      %2075 = vmatpush2.msra.mxu0 0.0
      %2076 = vmatprep.mubr.f32.mxu0 0.0
      %2077 = vmatmul.mubr.f32.gmra.mxu0 %v2010
      %v2078 = vpop.f32.mrf.mxu0
      %v2079 = vadd.f32 %v2006, %v2078
      %v2080 = vpop.f32.mrf.mxu0
      %2081 = vdwg.mxu0
      %v2082 = vxor.u32 %v2079, 2147483648
      %v2083 = vmul.f32 %v2082, 1.442695
      %v2084 = vpow.pop %v2083
      %v2085 = vadd.f32 %v2084, 1.0
      %v2086 = vrcp.pop %v2085
      %v2087 = vmul.f32 1.0, %v2086
      %v2088 = vmul.f32 %v2079, %v2087
      %2089 = vst.msk [vmem:[%s330] sm:$0xff] %vm2008, %v2088
      %p2090 = scmp.lt.s32.totalorder %s20, 1
      %s2091 = scalar_select %p2090, %s20, 1
      %s2092 = smul.addr %s2091, 8
      %s2093 = scalar_lea.vmem %s9, %s2092
      // Predicated region
      $region57: #{stem_block_forward.1} parent=55 // pred_check
        %p2094 = pneg %p232
      $region58: #{stem_block_forward.1} parent=55 // pred_check_branch
        %2096 = sbr.rel (%p2094) target = $region60
      $region59: #{stem_block_forward.1} parent=55 // pred_region
        _
      $region60: #{stem_block_forward.1} parent=55 // pred_fallthru
        _
    $region56: #{stem_block_forward.1} parent=5 // pred_fallthru
      _
    %p2097 = scmp.le.s32.totalorder 2, %s15
    // Predicated region
    $region61: #{stem_block_forward.1} parent=5 // pred_check
      %p2098 = pneg %p2097
    $region62: #{stem_block_forward.1} parent=5 // pred_check_branch
      %2100 = sbr.rel (%p2098) target = $region64
    $region63: #{stem_block_forward.1} parent=5 // pred_region
      %s2101 = ssub.s32 %s15, 2
      // Predicated region
      $region65: #{stem_block_forward.1} parent=63 // pred_check
        %p2102 = pneg %p238
      $region66: #{stem_block_forward.1} parent=63 // pred_check_branch
        %2104 = sbr.rel (%p2102) target = $region68
      $region67: #{stem_block_forward.1} parent=63 // pred_region
        %p2105 = scmp.lt.s32.totalorder %s21, 1
        %s2106 = scalar_select %p2105, %s21, 1
        %s2107 = smul.addr %s2106, 8
        %s2108 = scalar_lea.vmem %s9, %s2107
      $region68: #{stem_block_forward.1} parent=63 // pred_fallthru
        _
    $region64: #{stem_block_forward.1} parent=5 // pred_fallthru
      _
  $region6: #{stem_block_forward.1} parent=0 // loop_footer
    %s19 = sadd.s32 1, %s15
  $region7: #{stem_block_forward.1} parent=0 // loop_footer_branch
    %14 = sbr.rel target = $region3
  $region8: #{stem_block_forward.1} parent=0 // loop_exit
    _

</llo_original>
